<compile_context>
chip_gen: v5e
topology: v5e:2x2
jax: 0.10.0
libtpu: 0.0.40
codegen_flags: <defaults>
</compile_context>

<pallas_src>
import functools

import numpy as np
import jax
import jax.numpy as jnp
from jax import lax
from jax.experimental import pallas as pl
from jax.experimental.pallas import tpu as pltpu

EMBED_DIM = 128   # nn.Embedding(vocab_size, 128)
HIDDEN = 128      # nn.GRU(hidden_size=128)
VOCAB = 100       # synthetic vocab (len(words_to_ids) not available)
SEQ = 8           # example document length

# Above this many (timestep, doc) rows the input projection goes to VMEM scratch
# and the recurrence runs as a dynamic-trip-count fori_loop instead of a full unroll.
_UNROLL_MAX_ROWS = 256


def _round_up(x, m):
    return ((x + m - 1) // m) * m


def _make_gru_kernel(S_pad, B, H, V_pad, unrolled):
    """Kernel factory: one batch group (B docs, all padded to S_pad steps)."""
    N = S_pad * B

    def kernel(gmax_ref, ids_ref, lens_ref, proj_ref, whh_ref, bhn_ref,
               out_ref, *scratch):
        ids = ids_ref[0]          # (N, 1) int32, row index = t*B + b (time-major)
        lens = lens_ref[0]        # (B, 1) int32
        whh = whh_ref[...]        # (H, 3H) bf16/f32
        b_hn = bhn_ref[...]       # (1, H) f32

        # In-kernel embedding gather fused with the input projection:
        # one-hot(ids) @ precomputed (emb @ W_ih^T + bias) table.  One MXU matmul
        # for the whole group/sequence; biases for r/z (and b_ih) already folded in.
        onehot = (lax.broadcasted_iota(jnp.int32, (N, V_pad), 1) == ids
                  ).astype(proj_ref.dtype)                              # (N, V_pad)
        xproj = jnp.dot(onehot, proj_ref[...],
                        preferred_element_type=jnp.float32)             # (N, 3H) f32

        def step(xp, h):
            # Recurrent projection on the MXU (bf16 inputs, f32 accumulation).
            hproj = jnp.dot(h.astype(whh.dtype), whh,
                            preferred_element_type=jnp.float32)         # (B, 3H) f32
            # PyTorch GRU gate order [r, z, n]; gate math stays in f32.
            r = jax.nn.sigmoid(xp[:, 0:H] + hproj[:, 0:H])
            z = jax.nn.sigmoid(xp[:, H:2 * H] + hproj[:, H:2 * H])
            n = jnp.tanh(xp[:, 2 * H:3 * H] + r * (hproj[:, 2 * H:3 * H] + b_hn))
            return (1.0 - z) * n + z * h

        h0 = jnp.zeros((B, H), jnp.float32)

        if unrolled:
            # Small bucket: keep xproj as a value, fully unroll -> static slices.
            h = h0
            for t in range(S_pad):
                xp = xproj[t * B:(t + 1) * B, :]
                # Per-document freeze mask (docs shorter than S_pad).
                h = jnp.where(t < lens, step(xp, h), h)
        else:
            # Large bucket: xproj lives in VMEM scratch; dynamic trip count =
            # group max length so padded tail steps are skipped entirely.
            xproj_ref = scratch[0]
            xproj_ref[...] = xproj
            n_steps = gmax_ref[pl.program_id(0)]

            def body(t, h):
                row = pl.multiple_of(t * B, 8)
                xp = xproj_ref[pl.ds(row, B), :]
                return jnp.where(t < lens, step(xp, h), h)

            h = lax.fori_loop(0, n_steps, body, h0)

        out_ref[0] = h

    return kernel


@jax.jit
def _doc_tower_gru(gmax, ids_tm, lens_g, proj_table, whh_t, b_hn):
    """One fused dispatch: in-kernel gather + input projection + GRU recurrence."""
    G, N, _ = ids_tm.shape
    _, B_tile, _ = lens_g.shape
    S_pad = N // B_tile
    V_pad, H3 = proj_table.shape
    H = H3 // 3
    unrolled = N <= _UNROLL_MAX_ROWS

    kernel = _make_gru_kernel(S_pad, B_tile, H, V_pad, unrolled)
    scratch = [] if unrolled else [pltpu.VMEM((N, H3), jnp.float32)]

    grid_spec = pltpu.PrefetchScalarGridSpec(
        num_scalar_prefetch=1,           # gmax -> SMEM
        grid=(G,),
        in_specs=[
            pl.BlockSpec((1, N, 1), lambda g, gmax: (g, 0, 0)),        # ids (group)
            pl.BlockSpec((1, B_tile, 1), lambda g, gmax: (g, 0, 0)),   # lens (group)
            pl.BlockSpec((V_pad, H3), lambda g, gmax: (0, 0)),         # proj table
            pl.BlockSpec((H, H3), lambda g, gmax: (0, 0)),             # W_hh^T
            pl.BlockSpec((1, H), lambda g, gmax: (0, 0)),              # b_hn
        ],
        out_specs=pl.BlockSpec((1, B_tile, H), lambda g, gmax: (g, 0, 0)),
        scratch_shapes=scratch,
    )

    out = pl.pallas_call(
        kernel,
        out_shape=jax.ShapeDtypeStruct((G, B_tile, H), jnp.float32),
        grid_spec=grid_spec,
        compiler_params=pltpu.CompilerParams(
            dimension_semantics=("parallel",)),   # shards batch groups across TCs on v7x
    )(gmax, ids_tm, lens_g, proj_table, whh_t, b_hn)
    return out.reshape(G * B_tile, H)


def prepare_doc_tower_params(emb_table, w_ih, w_hh, b_ih, b_hh, *,
                             matmul_dtype=jnp.bfloat16):
    """One-time model-load prep: fuse frozen embedding with W_ih, fold biases, cast.

    proj_table[v] = emb[v] @ W_ih^T + b_ih + [b_hh_r, b_hh_z, 0]   (exact in f32).
    The n-gate recurrent bias b_hn stays separate (it sits inside r*(W_hn h + b_hn)).
    """
    emb = jnp.asarray(emb_table, jnp.float32)          # (V, E)
    w_ih = jnp.asarray(w_ih, jnp.float32)              # (3H, E)
    w_hh = jnp.asarray(w_hh, jnp.float32)              # (3H, H)
    b_ih = jnp.asarray(b_ih, jnp.float32)
    b_hh = jnp.asarray(b_hh, jnp.float32)
    H = w_hh.shape[1]
    V = emb.shape[0]

    bias_x = b_ih + jnp.concatenate([b_hh[:2 * H], jnp.zeros((H,), jnp.float32)])
    proj = emb @ w_ih.T + bias_x[None, :]              # (V, 3H) f32
    # Pad vocab to a lane-friendly contraction size for the in-kernel one-hot matmul.
    # TODO(synk): for a multi-MiB real vocab keep the table in HBM (pl.ANY) and DMA
    # row-gather the S rows instead of the one-hot matmul.
    V_pad = max(128, _round_up(V, 128))
    proj_pad = jnp.zeros((V_pad, 3 * H), jnp.float32).at[:V].set(proj)

    return dict(
        proj_table=proj_pad.astype(matmul_dtype),      # (V_pad, 3H)
        whh_t=w_hh.T.astype(matmul_dtype),             # (H, 3H)
        b_hn=b_hh[2 * H:3 * H].reshape(1, H),          # (1, H) f32
    )


def doc_tower_forward_batch(docs, params, *, b_tile=None):
    """Batched forward: list of non-empty token-id lists -> (len(docs), H) final states."""
    assert len(docs) > 0
    lens_list = [len(d) for d in docs]
    assert all(l > 0 for l in lens_list), "empty documents not supported in batch path"

    B = len(docs)
    if b_tile is None:
        b_tile = min(128, _round_up(B, 8))
    assert b_tile % 8 == 0
    B_pad = _round_up(B, b_tile)
    G = B_pad // b_tile
    S_pad = max(8, _round_up(max(lens_list), 8))       # bucketed -> few compiled variants
    N = S_pad * b_tile

    ids = np.zeros((B_pad, S_pad), np.int32)
    lens_arr = np.zeros((B_pad,), np.int32)
    for i, d in enumerate(docs):
        ids[i, :len(d)] = np.asarray(d, np.int32)
        lens_arr[i] = len(d)

    # Time-major flat ids per group: row index = t*B_TILE + b.
    ids_tm = ids.reshape(G, b_tile, S_pad).transpose(0, 2, 1).reshape(G, N, 1)
    lens_g = lens_arr.reshape(G, b_tile, 1)
    gmax = lens_arr.reshape(G, b_tile).max(axis=1).astype(np.int32)

    h = _doc_tower_gru(jnp.asarray(gmax), jnp.asarray(ids_tm), jnp.asarray(lens_g),
                       params["proj_table"], params["whh_t"], params["b_hn"])
    return h[:B]


def doc_tower_forward(token_ids, params):
    """Mirrors DocTower.forward: returns h_n of shape (HIDDEN,) or None on empty input."""
    if token_ids is None or len(token_ids) == 0:
        return None                                    # matches `if not x: return None`
    return doc_tower_forward_batch([list(token_ids)], params)[0]


def _ref_forward(token_ids, emb_table, w_ih, w_hh, b_ih, b_hh):
    """Pure-JAX f32 reference (PyTorch GRU semantics) for correctness checks."""
    embeds = jnp.take(jnp.asarray(emb_table, jnp.float32),
                      jnp.asarray(token_ids, jnp.int32), axis=0)
    H = w_hh.shape[1]

    def step(h, x_t):
        gi = x_t @ w_ih.T + b_ih
        gh = h @ w_hh.T + b_hh
        r = jax.nn.sigmoid(gi[0:H] + gh[0:H])
        z = jax.nn.sigmoid(gi[H:2 * H] + gh[H:2 * H])
        n = jnp.tanh(gi[2 * H:3 * H] + r * gh[2 * H:3 * H])
        return (1.0 - z) * n + z * h, None

    h_final, _ = lax.scan(step, jnp.zeros((H,), jnp.float32), embeds)
    return h_final


if __name__ == "__main__":
    key = jax.random.PRNGKey(0)
    k_emb, k_wih, k_whh, k_bih, k_bhh, k_ids, k_long = jax.random.split(key, 7)

    # Deterministic synthetic parameters (PyTorch-style uniform(-1/sqrt(H), 1/sqrt(H))).
    bound = 1.0 / (HIDDEN ** 0.5)
    emb_table = jax.random.normal(k_emb, (VOCAB, EMBED_DIM), jnp.float32)
    w_ih = jax.random.uniform(k_wih, (3 * HIDDEN, EMBED_DIM), jnp.float32, -bound, bound)
    w_hh = jax.random.uniform(k_whh, (3 * HIDDEN, HIDDEN), jnp.float32, -bound, bound)
    b_ih = jax.random.uniform(k_bih, (3 * HIDDEN,), jnp.float32, -bound, bound)
    b_hh = jax.random.uniform(k_bhh, (3 * HIDDEN,), jnp.float32, -bound, bound)

    params_f32 = prepare_doc_tower_params(emb_table, w_ih, w_hh, b_ih, b_hh,
                                          matmul_dtype=jnp.float32)
    params_bf16 = prepare_doc_tower_params(emb_table, w_ih, w_hh, b_ih, b_hh)  # bf16 default

    token_ids = [int(t) for t in jax.random.randint(k_ids, (SEQ,), 0, VOCAB, jnp.int32)]

    # 1) Single document, f32 path (exact check vs pure-JAX GRU).
    out = jax.block_until_ready(doc_tower_forward(token_ids, params_f32))
    ref = _ref_forward(token_ids, emb_table, w_ih, w_hh, b_ih, b_hh)
    assert out.shape == (HIDDEN,)
    assert jnp.allclose(out, ref, rtol=1e-4, atol=1e-5), "f32 mismatch vs pure-JAX GRU"

    # 2) Batched documents with mixed lengths (sublane batching + per-doc masking).
    docs = [token_ids, token_ids[:5], token_ids[:3], token_ids[:7]]
    outs = jax.block_until_ready(doc_tower_forward_batch(docs, params_f32))
    assert outs.shape == (len(docs), HIDDEN)
    for d, o in zip(docs, outs):
        r = _ref_forward(d, emb_table, w_ih, w_hh, b_ih, b_hh)
        assert jnp.allclose(o, r, rtol=1e-4, atol=1e-5), "batched mismatch"

    # 3) Many documents with a small batch tile -> multi-group grid (v7x parallel axis).
    many_keys = jax.random.split(k_ids, 20)
    many_docs = [[int(t) for t in jax.random.randint(many_keys[i], (1 + (i % 8),),
                                                     0, VOCAB, jnp.int32)]
                 for i in range(20)]
    outs_m = jax.block_until_ready(
        doc_tower_forward_batch(many_docs, params_f32, b_tile=8))
    assert outs_m.shape == (20, HIDDEN)
    for d, o in zip(many_docs, outs_m):
        r = _ref_forward(d, emb_table, w_ih, w_hh, b_ih, b_hh)
        assert jnp.allclose(o, r, rtol=1e-4, atol=1e-5), "multi-group mismatch"

    # 4) Long document -> VMEM-scratch + dynamic-trip-count fori_loop path.
    long_ids = [int(t) for t in jax.random.randint(k_long, (40,), 0, VOCAB, jnp.int32)]
    out_l = jax.block_until_ready(doc_tower_forward(long_ids, params_f32))
    ref_l = _ref_forward(long_ids, emb_table, w_ih, w_hh, b_ih, b_hh)
    assert jnp.allclose(out_l, ref_l, rtol=1e-4, atol=1e-5), "long-doc (fori path) mismatch"

    # 5) Default bf16 MXU-input path (f32 accumulation / gates / state).
    out_bf = jax.block_until_ready(doc_tower_forward(token_ids, params_bf16))
    assert out_bf.shape == (HIDDEN,)
    assert jnp.allclose(out_bf, ref, rtol=3e-2, atol=3e-2), "bf16 path drifted too far"

    # 6) Empty document -> None (matches `if not x: return None`).
    assert doc_tower_forward([], params_f32) is None

    print("KERNEL_OK")
</pallas_src>

<mosaic_0001>
module attributes {stable_mosaic.version = 11 : i64} {
  func.func @kernel(%arg0: i32, %arg1: memref<1xi32, #tpu.memory_space<smem>>, %arg2: memref<1x64x1xi32, #tpu.memory_space<vmem>>, %arg3: memref<1x8x1xi32, #tpu.memory_space<vmem>>, %arg4: memref<128x384xf32, #tpu.memory_space<vmem>>, %arg5: memref<128x384xf32, #tpu.memory_space<vmem>>, %arg6: memref<1x128xf32, #tpu.memory_space<vmem>>, %arg7: memref<1x8x128xf32, #tpu.memory_space<vmem>>) attributes {dimension_semantics = [#tpu.dimension_semantics<parallel>], iteration_bounds = array<i64: 1>, scalar_prefetch = 1 : i64, scratch_operands = 0 : i64, tpu.core_type = #tpu.core_type<tc>, window_params = [{transform_indices = @transform_0, window_bounds = array<i64: 1, 64, 1>}, {transform_indices = @transform_1, window_bounds = array<i64: 1, 8, 1>}, {pipeline_mode = #tpu.pipeline_mode<synchronous>, transform_indices = @transform_2, window_bounds = array<i64: 128, 384>}, {pipeline_mode = #tpu.pipeline_mode<synchronous>, transform_indices = @transform_3, window_bounds = array<i64: 128, 384>}, {pipeline_mode = #tpu.pipeline_mode<synchronous>, transform_indices = @transform_4, window_bounds = array<i64: 1, 128>}, {transform_indices = @transform_5, window_bounds = array<i64: 1, 8, 128>}]} {
    %c0 = arith.constant 0 : index
    %c0_0 = arith.constant 0 : index
    %c0_1 = arith.constant 0 : index
    %0 = vector.load %arg2[%c0, %c0_0, %c0_1] : memref<1x64x1xi32, #tpu.memory_space<vmem>>, vector<1x64x1xi32>
    %1 = vector.shape_cast %0 : vector<1x64x1xi32> to vector<64x1xi32>
    %c0_2 = arith.constant 0 : index
    %c0_3 = arith.constant 0 : index
    %c0_4 = arith.constant 0 : index
    %2 = vector.load %arg3[%c0_2, %c0_3, %c0_4] : memref<1x8x1xi32, #tpu.memory_space<vmem>>, vector<1x8x1xi32>
    %3 = vector.shape_cast %2 : vector<1x8x1xi32> to vector<8x1xi32>
    %c0_5 = arith.constant 0 : index
    %c0_6 = arith.constant 0 : index
    %4 = vector.load %arg5[%c0_5, %c0_6] : memref<128x384xf32, #tpu.memory_space<vmem>>, vector<128x384xf32>
    %c0_7 = arith.constant 0 : index
    %c0_8 = arith.constant 0 : index
    %5 = vector.load %arg6[%c0_7, %c0_8] : memref<1x128xf32, #tpu.memory_space<vmem>>, vector<1x128xf32>
    %6 = tpu.iota {dimensions = array<i32: 1>} : vector<64x128xi32>
    %7 = vector.broadcast %1 : vector<64x1xi32> to vector<64x128xi32>
    %8 = arith.cmpi eq, %6, %7 : vector<64x128xi32>
    %9 = arith.extui %8 : vector<64x128xi1> to vector<64x128xi32>
    %10 = arith.sitofp %9 : vector<64x128xi32> to vector<64x128xf32>
    %c0_9 = arith.constant 0 : index
    %c0_10 = arith.constant 0 : index
    %11 = vector.load %arg4[%c0_9, %c0_10] : memref<128x384xf32, #tpu.memory_space<vmem>>, vector<128x384xf32>
    %cst = arith.constant dense<0.000000e+00> : vector<64x384xf32>
    %12 = tpu.matmul %10, %11, %cst {dimension_numbers = #tpu.dot_dimension_numbers<[1], [0], [0], [1], [0, 0, 1, 1], [], []>} : vector<64x128xf32>, vector<128x384xf32>, vector<64x384xf32> -> vector<64x384xf32>
    %cst_11 = arith.constant 0.000000e+00 : f32
    %13 = vector.broadcast %cst_11 : f32 to vector<8x128xf32>
    %14 = vector.extract_strided_slice %12 {offsets = [0, 0], sizes = [8, 384], strides = [1, 1]} : vector<64x384xf32> to vector<8x384xf32>
    %c0_i32 = arith.constant 0 : i32
    %15 = vector.broadcast %c0_i32 : i32 to vector<8x1xi32>
    %16 = arith.cmpi sgt, %3, %15 : vector<8x1xi32>
    %cst_12 = arith.constant dense<0.000000e+00> : vector<8x384xf32>
    %17 = tpu.matmul %13, %4, %cst_12 {dimension_numbers = #tpu.dot_dimension_numbers<[1], [0], [0], [1], [0, 0, 1, 1], [], []>} : vector<8x128xf32>, vector<128x384xf32>, vector<8x384xf32> -> vector<8x384xf32>
    %18 = vector.extract_strided_slice %14 {offsets = [0, 0], sizes = [8, 128], strides = [1, 1]} : vector<8x384xf32> to vector<8x128xf32>
    %19 = vector.extract_strided_slice %17 {offsets = [0, 0], sizes = [8, 128], strides = [1, 1]} : vector<8x384xf32> to vector<8x128xf32>
    %20 = arith.addf %18, %19 : vector<8x128xf32>
    %21 = arith.negf %20 : vector<8x128xf32>
    %22 = math.exp %21 : vector<8x128xf32>
    %cst_13 = arith.constant 1.000000e+00 : f32
    %23 = vector.broadcast %cst_13 : f32 to vector<8x128xf32>
    %24 = arith.addf %23, %22 : vector<8x128xf32>
    %25 = arith.divf %23, %24 : vector<8x128xf32>
    %26 = vector.extract_strided_slice %14 {offsets = [0, 128], sizes = [8, 128], strides = [1, 1]} : vector<8x384xf32> to vector<8x128xf32>
    %27 = vector.extract_strided_slice %17 {offsets = [0, 128], sizes = [8, 128], strides = [1, 1]} : vector<8x384xf32> to vector<8x128xf32>
    %28 = arith.addf %26, %27 : vector<8x128xf32>
    %29 = arith.negf %28 : vector<8x128xf32>
    %30 = math.exp %29 : vector<8x128xf32>
    %cst_14 = arith.constant 1.000000e+00 : f32
    %31 = vector.broadcast %cst_14 : f32 to vector<8x128xf32>
    %32 = arith.addf %31, %30 : vector<8x128xf32>
    %33 = arith.divf %31, %32 : vector<8x128xf32>
    %34 = vector.extract_strided_slice %14 {offsets = [0, 256], sizes = [8, 128], strides = [1, 1]} : vector<8x384xf32> to vector<8x128xf32>
    %35 = vector.extract_strided_slice %17 {offsets = [0, 256], sizes = [8, 128], strides = [1, 1]} : vector<8x384xf32> to vector<8x128xf32>
    %36 = vector.broadcast %5 : vector<1x128xf32> to vector<8x128xf32>
    %37 = arith.addf %35, %36 : vector<8x128xf32>
    %38 = arith.mulf %25, %37 : vector<8x128xf32>
    %39 = arith.addf %34, %38 : vector<8x128xf32>
    %40 = math.tanh %39 : vector<8x128xf32>
    %cst_15 = arith.constant 1.000000e+00 : f32
    %41 = vector.broadcast %cst_15 : f32 to vector<8x128xf32>
    %42 = arith.subf %41, %33 : vector<8x128xf32>
    %43 = arith.mulf %42, %40 : vector<8x128xf32>
    %44 = arith.mulf %33, %13 : vector<8x128xf32>
    %45 = arith.addf %43, %44 : vector<8x128xf32>
    %46 = vector.shape_cast %16 : vector<8x1xi1> to vector<8x1xi1>
    %47 = vector.broadcast %46 : vector<8x1xi1> to vector<8x128xi1>
    %48 = arith.select %47, %45, %13 : vector<8x128xi1>, vector<8x128xf32>
    %49 = vector.extract_strided_slice %12 {offsets = [8, 0], sizes = [8, 384], strides = [1, 1]} : vector<64x384xf32> to vector<8x384xf32>
    %c1_i32 = arith.constant 1 : i32
    %50 = vector.broadcast %c1_i32 : i32 to vector<8x1xi32>
    %51 = arith.cmpi sgt, %3, %50 : vector<8x1xi32>
    %cst_16 = arith.constant dense<0.000000e+00> : vector<8x384xf32>
    %52 = tpu.matmul %48, %4, %cst_16 {dimension_numbers = #tpu.dot_dimension_numbers<[1], [0], [0], [1], [0, 0, 1, 1], [], []>} : vector<8x128xf32>, vector<128x384xf32>, vector<8x384xf32> -> vector<8x384xf32>
    %53 = vector.extract_strided_slice %49 {offsets = [0, 0], sizes = [8, 128], strides = [1, 1]} : vector<8x384xf32> to vector<8x128xf32>
    %54 = vector.extract_strided_slice %52 {offsets = [0, 0], sizes = [8, 128], strides = [1, 1]} : vector<8x384xf32> to vector<8x128xf32>
    %55 = arith.addf %53, %54 : vector<8x128xf32>
    %56 = arith.negf %55 : vector<8x128xf32>
    %57 = math.exp %56 : vector<8x128xf32>
    %cst_17 = arith.constant 1.000000e+00 : f32
    %58 = vector.broadcast %cst_17 : f32 to vector<8x128xf32>
    %59 = arith.addf %58, %57 : vector<8x128xf32>
    %60 = arith.divf %58, %59 : vector<8x128xf32>
    %61 = vector.extract_strided_slice %49 {offsets = [0, 128], sizes = [8, 128], strides = [1, 1]} : vector<8x384xf32> to vector<8x128xf32>
    %62 = vector.extract_strided_slice %52 {offsets = [0, 128], sizes = [8, 128], strides = [1, 1]} : vector<8x384xf32> to vector<8x128xf32>
    %63 = arith.addf %61, %62 : vector<8x128xf32>
    %64 = arith.negf %63 : vector<8x128xf32>
    %65 = math.exp %64 : vector<8x128xf32>
    %cst_18 = arith.constant 1.000000e+00 : f32
    %66 = vector.broadcast %cst_18 : f32 to vector<8x128xf32>
    %67 = arith.addf %66, %65 : vector<8x128xf32>
    %68 = arith.divf %66, %67 : vector<8x128xf32>
    %69 = vector.extract_strided_slice %49 {offsets = [0, 256], sizes = [8, 128], strides = [1, 1]} : vector<8x384xf32> to vector<8x128xf32>
    %70 = vector.extract_strided_slice %52 {offsets = [0, 256], sizes = [8, 128], strides = [1, 1]} : vector<8x384xf32> to vector<8x128xf32>
    %71 = vector.broadcast %5 : vector<1x128xf32> to vector<8x128xf32>
    %72 = arith.addf %70, %71 : vector<8x128xf32>
    %73 = arith.mulf %60, %72 : vector<8x128xf32>
    %74 = arith.addf %69, %73 : vector<8x128xf32>
    %75 = math.tanh %74 : vector<8x128xf32>
    %cst_19 = arith.constant 1.000000e+00 : f32
    %76 = vector.broadcast %cst_19 : f32 to vector<8x128xf32>
    %77 = arith.subf %76, %68 : vector<8x128xf32>
    %78 = arith.mulf %77, %75 : vector<8x128xf32>
    %79 = arith.mulf %68, %48 : vector<8x128xf32>
    %80 = arith.addf %78, %79 : vector<8x128xf32>
    %81 = vector.shape_cast %51 : vector<8x1xi1> to vector<8x1xi1>
    %82 = vector.broadcast %81 : vector<8x1xi1> to vector<8x128xi1>
    %83 = arith.select %82, %80, %48 : vector<8x128xi1>, vector<8x128xf32>
    %84 = vector.extract_strided_slice %12 {offsets = [16, 0], sizes = [8, 384], strides = [1, 1]} : vector<64x384xf32> to vector<8x384xf32>
    %c2_i32 = arith.constant 2 : i32
    %85 = vector.broadcast %c2_i32 : i32 to vector<8x1xi32>
    %86 = arith.cmpi sgt, %3, %85 : vector<8x1xi32>
    %cst_20 = arith.constant dense<0.000000e+00> : vector<8x384xf32>
    %87 = tpu.matmul %83, %4, %cst_20 {dimension_numbers = #tpu.dot_dimension_numbers<[1], [0], [0], [1], [0, 0, 1, 1], [], []>} : vector<8x128xf32>, vector<128x384xf32>, vector<8x384xf32> -> vector<8x384xf32>
    %88 = vector.extract_strided_slice %84 {offsets = [0, 0], sizes = [8, 128], strides = [1, 1]} : vector<8x384xf32> to vector<8x128xf32>
    %89 = vector.extract_strided_slice %87 {offsets = [0, 0], sizes = [8, 128], strides = [1, 1]} : vector<8x384xf32> to vector<8x128xf32>
    %90 = arith.addf %88, %89 : vector<8x128xf32>
    %91 = arith.negf %90 : vector<8x128xf32>
    %92 = math.exp %91 : vector<8x128xf32>
    %cst_21 = arith.constant 1.000000e+00 : f32
    %93 = vector.broadcast %cst_21 : f32 to vector<8x128xf32>
    %94 = arith.addf %93, %92 : vector<8x128xf32>
    %95 = arith.divf %93, %94 : vector<8x128xf32>
    %96 = vector.extract_strided_slice %84 {offsets = [0, 128], sizes = [8, 128], strides = [1, 1]} : vector<8x384xf32> to vector<8x128xf32>
    %97 = vector.extract_strided_slice %87 {offsets = [0, 128], sizes = [8, 128], strides = [1, 1]} : vector<8x384xf32> to vector<8x128xf32>
    %98 = arith.addf %96, %97 : vector<8x128xf32>
    %99 = arith.negf %98 : vector<8x128xf32>
    %100 = math.exp %99 : vector<8x128xf32>
    %cst_22 = arith.constant 1.000000e+00 : f32
    %101 = vector.broadcast %cst_22 : f32 to vector<8x128xf32>
    %102 = arith.addf %101, %100 : vector<8x128xf32>
    %103 = arith.divf %101, %102 : vector<8x128xf32>
    %104 = vector.extract_strided_slice %84 {offsets = [0, 256], sizes = [8, 128], strides = [1, 1]} : vector<8x384xf32> to vector<8x128xf32>
    %105 = vector.extract_strided_slice %87 {offsets = [0, 256], sizes = [8, 128], strides = [1, 1]} : vector<8x384xf32> to vector<8x128xf32>
    %106 = vector.broadcast %5 : vector<1x128xf32> to vector<8x128xf32>
    %107 = arith.addf %105, %106 : vector<8x128xf32>
    %108 = arith.mulf %95, %107 : vector<8x128xf32>
    %109 = arith.addf %104, %108 : vector<8x128xf32>
    %110 = math.tanh %109 : vector<8x128xf32>
    %cst_23 = arith.constant 1.000000e+00 : f32
    %111 = vector.broadcast %cst_23 : f32 to vector<8x128xf32>
    %112 = arith.subf %111, %103 : vector<8x128xf32>
    %113 = arith.mulf %112, %110 : vector<8x128xf32>
    %114 = arith.mulf %103, %83 : vector<8x128xf32>
    %115 = arith.addf %113, %114 : vector<8x128xf32>
    %116 = vector.shape_cast %86 : vector<8x1xi1> to vector<8x1xi1>
    %117 = vector.broadcast %116 : vector<8x1xi1> to vector<8x128xi1>
    %118 = arith.select %117, %115, %83 : vector<8x128xi1>, vector<8x128xf32>
    %119 = vector.extract_strided_slice %12 {offsets = [24, 0], sizes = [8, 384], strides = [1, 1]} : vector<64x384xf32> to vector<8x384xf32>
    %c3_i32 = arith.constant 3 : i32
    %120 = vector.broadcast %c3_i32 : i32 to vector<8x1xi32>
    %121 = arith.cmpi sgt, %3, %120 : vector<8x1xi32>
    %cst_24 = arith.constant dense<0.000000e+00> : vector<8x384xf32>
    %122 = tpu.matmul %118, %4, %cst_24 {dimension_numbers = #tpu.dot_dimension_numbers<[1], [0], [0], [1], [0, 0, 1, 1], [], []>} : vector<8x128xf32>, vector<128x384xf32>, vector<8x384xf32> -> vector<8x384xf32>
    %123 = vector.extract_strided_slice %119 {offsets = [0, 0], sizes = [8, 128], strides = [1, 1]} : vector<8x384xf32> to vector<8x128xf32>
    %124 = vector.extract_strided_slice %122 {offsets = [0, 0], sizes = [8, 128], strides = [1, 1]} : vector<8x384xf32> to vector<8x128xf32>
    %125 = arith.addf %123, %124 : vector<8x128xf32>
    %126 = arith.negf %125 : vector<8x128xf32>
    %127 = math.exp %126 : vector<8x128xf32>
    %cst_25 = arith.constant 1.000000e+00 : f32
    %128 = vector.broadcast %cst_25 : f32 to vector<8x128xf32>
    %129 = arith.addf %128, %127 : vector<8x128xf32>
    %130 = arith.divf %128, %129 : vector<8x128xf32>
    %131 = vector.extract_strided_slice %119 {offsets = [0, 128], sizes = [8, 128], strides = [1, 1]} : vector<8x384xf32> to vector<8x128xf32>
    %132 = vector.extract_strided_slice %122 {offsets = [0, 128], sizes = [8, 128], strides = [1, 1]} : vector<8x384xf32> to vector<8x128xf32>
    %133 = arith.addf %131, %132 : vector<8x128xf32>
    %134 = arith.negf %133 : vector<8x128xf32>
    %135 = math.exp %134 : vector<8x128xf32>
    %cst_26 = arith.constant 1.000000e+00 : f32
    %136 = vector.broadcast %cst_26 : f32 to vector<8x128xf32>
    %137 = arith.addf %136, %135 : vector<8x128xf32>
    %138 = arith.divf %136, %137 : vector<8x128xf32>
    %139 = vector.extract_strided_slice %119 {offsets = [0, 256], sizes = [8, 128], strides = [1, 1]} : vector<8x384xf32> to vector<8x128xf32>
    %140 = vector.extract_strided_slice %122 {offsets = [0, 256], sizes = [8, 128], strides = [1, 1]} : vector<8x384xf32> to vector<8x128xf32>
    %141 = vector.broadcast %5 : vector<1x128xf32> to vector<8x128xf32>
    %142 = arith.addf %140, %141 : vector<8x128xf32>
    %143 = arith.mulf %130, %142 : vector<8x128xf32>
    %144 = arith.addf %139, %143 : vector<8x128xf32>
    %145 = math.tanh %144 : vector<8x128xf32>
    %cst_27 = arith.constant 1.000000e+00 : f32
    %146 = vector.broadcast %cst_27 : f32 to vector<8x128xf32>
    %147 = arith.subf %146, %138 : vector<8x128xf32>
    %148 = arith.mulf %147, %145 : vector<8x128xf32>
    %149 = arith.mulf %138, %118 : vector<8x128xf32>
    %150 = arith.addf %148, %149 : vector<8x128xf32>
    %151 = vector.shape_cast %121 : vector<8x1xi1> to vector<8x1xi1>
    %152 = vector.broadcast %151 : vector<8x1xi1> to vector<8x128xi1>
    %153 = arith.select %152, %150, %118 : vector<8x128xi1>, vector<8x128xf32>
    %154 = vector.extract_strided_slice %12 {offsets = [32, 0], sizes = [8, 384], strides = [1, 1]} : vector<64x384xf32> to vector<8x384xf32>
    %c4_i32 = arith.constant 4 : i32
    %155 = vector.broadcast %c4_i32 : i32 to vector<8x1xi32>
    %156 = arith.cmpi sgt, %3, %155 : vector<8x1xi32>
    %cst_28 = arith.constant dense<0.000000e+00> : vector<8x384xf32>
    %157 = tpu.matmul %153, %4, %cst_28 {dimension_numbers = #tpu.dot_dimension_numbers<[1], [0], [0], [1], [0, 0, 1, 1], [], []>} : vector<8x128xf32>, vector<128x384xf32>, vector<8x384xf32> -> vector<8x384xf32>
    %158 = vector.extract_strided_slice %154 {offsets = [0, 0], sizes = [8, 128], strides = [1, 1]} : vector<8x384xf32> to vector<8x128xf32>
    %159 = vector.extract_strided_slice %157 {offsets = [0, 0], sizes = [8, 128], strides = [1, 1]} : vector<8x384xf32> to vector<8x128xf32>
    %160 = arith.addf %158, %159 : vector<8x128xf32>
    %161 = arith.negf %160 : vector<8x128xf32>
    %162 = math.exp %161 : vector<8x128xf32>
    %cst_29 = arith.constant 1.000000e+00 : f32
    %163 = vector.broadcast %cst_29 : f32 to vector<8x128xf32>
    %164 = arith.addf %163, %162 : vector<8x128xf32>
    %165 = arith.divf %163, %164 : vector<8x128xf32>
    %166 = vector.extract_strided_slice %154 {offsets = [0, 128], sizes = [8, 128], strides = [1, 1]} : vector<8x384xf32> to vector<8x128xf32>
    %167 = vector.extract_strided_slice %157 {offsets = [0, 128], sizes = [8, 128], strides = [1, 1]} : vector<8x384xf32> to vector<8x128xf32>
    %168 = arith.addf %166, %167 : vector<8x128xf32>
    %169 = arith.negf %168 : vector<8x128xf32>
    %170 = math.exp %169 : vector<8x128xf32>
    %cst_30 = arith.constant 1.000000e+00 : f32
    %171 = vector.broadcast %cst_30 : f32 to vector<8x128xf32>
    %172 = arith.addf %171, %170 : vector<8x128xf32>
    %173 = arith.divf %171, %172 : vector<8x128xf32>
    %174 = vector.extract_strided_slice %154 {offsets = [0, 256], sizes = [8, 128], strides = [1, 1]} : vector<8x384xf32> to vector<8x128xf32>
    %175 = vector.extract_strided_slice %157 {offsets = [0, 256], sizes = [8, 128], strides = [1, 1]} : vector<8x384xf32> to vector<8x128xf32>
    %176 = vector.broadcast %5 : vector<1x128xf32> to vector<8x128xf32>
    %177 = arith.addf %175, %176 : vector<8x128xf32>
    %178 = arith.mulf %165, %177 : vector<8x128xf32>
    %179 = arith.addf %174, %178 : vector<8x128xf32>
    %180 = math.tanh %179 : vector<8x128xf32>
    %cst_31 = arith.constant 1.000000e+00 : f32
    %181 = vector.broadcast %cst_31 : f32 to vector<8x128xf32>
    %182 = arith.subf %181, %173 : vector<8x128xf32>
    %183 = arith.mulf %182, %180 : vector<8x128xf32>
    %184 = arith.mulf %173, %153 : vector<8x128xf32>
    %185 = arith.addf %183, %184 : vector<8x128xf32>
    %186 = vector.shape_cast %156 : vector<8x1xi1> to vector<8x1xi1>
    %187 = vector.broadcast %186 : vector<8x1xi1> to vector<8x128xi1>
    %188 = arith.select %187, %185, %153 : vector<8x128xi1>, vector<8x128xf32>
    %189 = vector.extract_strided_slice %12 {offsets = [40, 0], sizes = [8, 384], strides = [1, 1]} : vector<64x384xf32> to vector<8x384xf32>
    %c5_i32 = arith.constant 5 : i32
    %190 = vector.broadcast %c5_i32 : i32 to vector<8x1xi32>
    %191 = arith.cmpi sgt, %3, %190 : vector<8x1xi32>
    %cst_32 = arith.constant dense<0.000000e+00> : vector<8x384xf32>
    %192 = tpu.matmul %188, %4, %cst_32 {dimension_numbers = #tpu.dot_dimension_numbers<[1], [0], [0], [1], [0, 0, 1, 1], [], []>} : vector<8x128xf32>, vector<128x384xf32>, vector<8x384xf32> -> vector<8x384xf32>
    %193 = vector.extract_strided_slice %189 {offsets = [0, 0], sizes = [8, 128], strides = [1, 1]} : vector<8x384xf32> to vector<8x128xf32>
    %194 = vector.extract_strided_slice %192 {offsets = [0, 0], sizes = [8, 128], strides = [1, 1]} : vector<8x384xf32> to vector<8x128xf32>
    %195 = arith.addf %193, %194 : vector<8x128xf32>
    %196 = arith.negf %195 : vector<8x128xf32>
    %197 = math.exp %196 : vector<8x128xf32>
    %cst_33 = arith.constant 1.000000e+00 : f32
    %198 = vector.broadcast %cst_33 : f32 to vector<8x128xf32>
    %199 = arith.addf %198, %197 : vector<8x128xf32>
    %200 = arith.divf %198, %199 : vector<8x128xf32>
    %201 = vector.extract_strided_slice %189 {offsets = [0, 128], sizes = [8, 128], strides = [1, 1]} : vector<8x384xf32> to vector<8x128xf32>
    %202 = vector.extract_strided_slice %192 {offsets = [0, 128], sizes = [8, 128], strides = [1, 1]} : vector<8x384xf32> to vector<8x128xf32>
    %203 = arith.addf %201, %202 : vector<8x128xf32>
    %204 = arith.negf %203 : vector<8x128xf32>
    %205 = math.exp %204 : vector<8x128xf32>
    %cst_34 = arith.constant 1.000000e+00 : f32
    %206 = vector.broadcast %cst_34 : f32 to vector<8x128xf32>
    %207 = arith.addf %206, %205 : vector<8x128xf32>
    %208 = arith.divf %206, %207 : vector<8x128xf32>
    %209 = vector.extract_strided_slice %189 {offsets = [0, 256], sizes = [8, 128], strides = [1, 1]} : vector<8x384xf32> to vector<8x128xf32>
    %210 = vector.extract_strided_slice %192 {offsets = [0, 256], sizes = [8, 128], strides = [1, 1]} : vector<8x384xf32> to vector<8x128xf32>
    %211 = vector.broadcast %5 : vector<1x128xf32> to vector<8x128xf32>
    %212 = arith.addf %210, %211 : vector<8x128xf32>
    %213 = arith.mulf %200, %212 : vector<8x128xf32>
    %214 = arith.addf %209, %213 : vector<8x128xf32>
    %215 = math.tanh %214 : vector<8x128xf32>
    %cst_35 = arith.constant 1.000000e+00 : f32
    %216 = vector.broadcast %cst_35 : f32 to vector<8x128xf32>
    %217 = arith.subf %216, %208 : vector<8x128xf32>
    %218 = arith.mulf %217, %215 : vector<8x128xf32>
    %219 = arith.mulf %208, %188 : vector<8x128xf32>
    %220 = arith.addf %218, %219 : vector<8x128xf32>
    %221 = vector.shape_cast %191 : vector<8x1xi1> to vector<8x1xi1>
    %222 = vector.broadcast %221 : vector<8x1xi1> to vector<8x128xi1>
    %223 = arith.select %222, %220, %188 : vector<8x128xi1>, vector<8x128xf32>
    %224 = vector.extract_strided_slice %12 {offsets = [48, 0], sizes = [8, 384], strides = [1, 1]} : vector<64x384xf32> to vector<8x384xf32>
    %c6_i32 = arith.constant 6 : i32
    %225 = vector.broadcast %c6_i32 : i32 to vector<8x1xi32>
    %226 = arith.cmpi sgt, %3, %225 : vector<8x1xi32>
    %cst_36 = arith.constant dense<0.000000e+00> : vector<8x384xf32>
    %227 = tpu.matmul %223, %4, %cst_36 {dimension_numbers = #tpu.dot_dimension_numbers<[1], [0], [0], [1], [0, 0, 1, 1], [], []>} : vector<8x128xf32>, vector<128x384xf32>, vector<8x384xf32> -> vector<8x384xf32>
    %228 = vector.extract_strided_slice %224 {offsets = [0, 0], sizes = [8, 128], strides = [1, 1]} : vector<8x384xf32> to vector<8x128xf32>
    %229 = vector.extract_strided_slice %227 {offsets = [0, 0], sizes = [8, 128], strides = [1, 1]} : vector<8x384xf32> to vector<8x128xf32>
    %230 = arith.addf %228, %229 : vector<8x128xf32>
    %231 = arith.negf %230 : vector<8x128xf32>
    %232 = math.exp %231 : vector<8x128xf32>
    %cst_37 = arith.constant 1.000000e+00 : f32
    %233 = vector.broadcast %cst_37 : f32 to vector<8x128xf32>
    %234 = arith.addf %233, %232 : vector<8x128xf32>
    %235 = arith.divf %233, %234 : vector<8x128xf32>
    %236 = vector.extract_strided_slice %224 {offsets = [0, 128], sizes = [8, 128], strides = [1, 1]} : vector<8x384xf32> to vector<8x128xf32>
    %237 = vector.extract_strided_slice %227 {offsets = [0, 128], sizes = [8, 128], strides = [1, 1]} : vector<8x384xf32> to vector<8x128xf32>
    %238 = arith.addf %236, %237 : vector<8x128xf32>
    %239 = arith.negf %238 : vector<8x128xf32>
    %240 = math.exp %239 : vector<8x128xf32>
    %cst_38 = arith.constant 1.000000e+00 : f32
    %241 = vector.broadcast %cst_38 : f32 to vector<8x128xf32>
    %242 = arith.addf %241, %240 : vector<8x128xf32>
    %243 = arith.divf %241, %242 : vector<8x128xf32>
    %244 = vector.extract_strided_slice %224 {offsets = [0, 256], sizes = [8, 128], strides = [1, 1]} : vector<8x384xf32> to vector<8x128xf32>
    %245 = vector.extract_strided_slice %227 {offsets = [0, 256], sizes = [8, 128], strides = [1, 1]} : vector<8x384xf32> to vector<8x128xf32>
    %246 = vector.broadcast %5 : vector<1x128xf32> to vector<8x128xf32>
    %247 = arith.addf %245, %246 : vector<8x128xf32>
    %248 = arith.mulf %235, %247 : vector<8x128xf32>
    %249 = arith.addf %244, %248 : vector<8x128xf32>
    %250 = math.tanh %249 : vector<8x128xf32>
    %cst_39 = arith.constant 1.000000e+00 : f32
    %251 = vector.broadcast %cst_39 : f32 to vector<8x128xf32>
    %252 = arith.subf %251, %243 : vector<8x128xf32>
    %253 = arith.mulf %252, %250 : vector<8x128xf32>
    %254 = arith.mulf %243, %223 : vector<8x128xf32>
    %255 = arith.addf %253, %254 : vector<8x128xf32>
    %256 = vector.shape_cast %226 : vector<8x1xi1> to vector<8x1xi1>
    %257 = vector.broadcast %256 : vector<8x1xi1> to vector<8x128xi1>
    %258 = arith.select %257, %255, %223 : vector<8x128xi1>, vector<8x128xf32>
    %259 = vector.extract_strided_slice %12 {offsets = [56, 0], sizes = [8, 384], strides = [1, 1]} : vector<64x384xf32> to vector<8x384xf32>
    %c7_i32 = arith.constant 7 : i32
    %260 = vector.broadcast %c7_i32 : i32 to vector<8x1xi32>
    %261 = arith.cmpi sgt, %3, %260 : vector<8x1xi32>
    %cst_40 = arith.constant dense<0.000000e+00> : vector<8x384xf32>
    %262 = tpu.matmul %258, %4, %cst_40 {dimension_numbers = #tpu.dot_dimension_numbers<[1], [0], [0], [1], [0, 0, 1, 1], [], []>} : vector<8x128xf32>, vector<128x384xf32>, vector<8x384xf32> -> vector<8x384xf32>
    %263 = vector.extract_strided_slice %259 {offsets = [0, 0], sizes = [8, 128], strides = [1, 1]} : vector<8x384xf32> to vector<8x128xf32>
    %264 = vector.extract_strided_slice %262 {offsets = [0, 0], sizes = [8, 128], strides = [1, 1]} : vector<8x384xf32> to vector<8x128xf32>
    %265 = arith.addf %263, %264 : vector<8x128xf32>
    %266 = arith.negf %265 : vector<8x128xf32>
    %267 = math.exp %266 : vector<8x128xf32>
    %cst_41 = arith.constant 1.000000e+00 : f32
    %268 = vector.broadcast %cst_41 : f32 to vector<8x128xf32>
    %269 = arith.addf %268, %267 : vector<8x128xf32>
    %270 = arith.divf %268, %269 : vector<8x128xf32>
    %271 = vector.extract_strided_slice %259 {offsets = [0, 128], sizes = [8, 128], strides = [1, 1]} : vector<8x384xf32> to vector<8x128xf32>
    %272 = vector.extract_strided_slice %262 {offsets = [0, 128], sizes = [8, 128], strides = [1, 1]} : vector<8x384xf32> to vector<8x128xf32>
    %273 = arith.addf %271, %272 : vector<8x128xf32>
    %274 = arith.negf %273 : vector<8x128xf32>
    %275 = math.exp %274 : vector<8x128xf32>
    %cst_42 = arith.constant 1.000000e+00 : f32
    %276 = vector.broadcast %cst_42 : f32 to vector<8x128xf32>
    %277 = arith.addf %276, %275 : vector<8x128xf32>
    %278 = arith.divf %276, %277 : vector<8x128xf32>
    %279 = vector.extract_strided_slice %259 {offsets = [0, 256], sizes = [8, 128], strides = [1, 1]} : vector<8x384xf32> to vector<8x128xf32>
    %280 = vector.extract_strided_slice %262 {offsets = [0, 256], sizes = [8, 128], strides = [1, 1]} : vector<8x384xf32> to vector<8x128xf32>
    %281 = vector.broadcast %5 : vector<1x128xf32> to vector<8x128xf32>
    %282 = arith.addf %280, %281 : vector<8x128xf32>
    %283 = arith.mulf %270, %282 : vector<8x128xf32>
    %284 = arith.addf %279, %283 : vector<8x128xf32>
    %285 = math.tanh %284 : vector<8x128xf32>
    %cst_43 = arith.constant 1.000000e+00 : f32
    %286 = vector.broadcast %cst_43 : f32 to vector<8x128xf32>
    %287 = arith.subf %286, %278 : vector<8x128xf32>
    %288 = arith.mulf %287, %285 : vector<8x128xf32>
    %289 = arith.mulf %278, %258 : vector<8x128xf32>
    %290 = arith.addf %288, %289 : vector<8x128xf32>
    %291 = vector.shape_cast %261 : vector<8x1xi1> to vector<8x1xi1>
    %292 = vector.broadcast %291 : vector<8x1xi1> to vector<8x128xi1>
    %293 = arith.select %292, %290, %258 : vector<8x128xi1>, vector<8x128xf32>
    %c0_44 = arith.constant 0 : index
    %c0_45 = arith.constant 0 : index
    %c0_46 = arith.constant 0 : index
    %294 = vector.load %arg7[%c0_44, %c0_45, %c0_46] : memref<1x8x128xf32, #tpu.memory_space<vmem>>, vector<1x8x128xf32>
    %295 = vector.shape_cast %294 : vector<1x8x128xf32> to vector<8x128xf32>
    %296 = vector.shape_cast %293 : vector<8x128xf32> to vector<1x8x128xf32>
    tpu.vector_store %arg7[%c0_44, %c0_45, %c0_46], %296 {strides = array<i32>} : memref<1x8x128xf32, #tpu.memory_space<vmem>>, vector<1x8x128xf32>,
    return
  }
  func.func @transform_0(%arg0: i32, %arg1: memref<1xi32, #tpu.memory_space<smem>>) -> (i32, i32, i32) {
    %c0_i32 = arith.constant 0 : i32
    %c0_i32_0 = arith.constant 0 : i32
    %c0_i32_1 = arith.constant 0 : i32
    return %arg0, %c0_i32, %c0_i32_0 : i32, i32, i32
  }
  func.func @transform_1(%arg0: i32, %arg1: memref<1xi32, #tpu.memory_space<smem>>) -> (i32, i32, i32) {
    %c0_i32 = arith.constant 0 : i32
    %c0_i32_0 = arith.constant 0 : i32
    %c0_i32_1 = arith.constant 0 : i32
    return %arg0, %c0_i32, %c0_i32_0 : i32, i32, i32
  }
  func.func @transform_2(%arg0: i32, %arg1: memref<1xi32, #tpu.memory_space<smem>>) -> (i32, i32) {
    %c0_i32 = arith.constant 0 : i32
    %c0_i32_0 = arith.constant 0 : i32
    %c0_i32_1 = arith.constant 0 : i32
    return %c0_i32, %c0_i32_0 : i32, i32
  }
  func.func @transform_3(%arg0: i32, %arg1: memref<1xi32, #tpu.memory_space<smem>>) -> (i32, i32) {
    %c0_i32 = arith.constant 0 : i32
    %c0_i32_0 = arith.constant 0 : i32
    %c0_i32_1 = arith.constant 0 : i32
    return %c0_i32, %c0_i32_0 : i32, i32
  }
  func.func @transform_4(%arg0: i32, %arg1: memref<1xi32, #tpu.memory_space<smem>>) -> (i32, i32) {
    %c0_i32 = arith.constant 0 : i32
    %c0_i32_0 = arith.constant 0 : i32
    %c0_i32_1 = arith.constant 0 : i32
    return %c0_i32, %c0_i32_0 : i32, i32
  }
  func.func @transform_5(%arg0: i32, %arg1: memref<1xi32, #tpu.memory_space<smem>>) -> (i32, i32, i32) {
    %c0_i32 = arith.constant 0 : i32
    %c0_i32_0 = arith.constant 0 : i32
    %c0_i32_1 = arith.constant 0 : i32
    return %arg0, %c0_i32, %c0_i32_0 : i32, i32, i32
  }
}

</mosaic_0001>

<llo_original>
// kernel: _doc_tower_gru.1
$region0: #{_doc_tower_gru.1}
  #allocation0 [shape = 'u32[]', space=smem, size = 0x4, offset = 0x4, fixed_abs, tag = 'smem constant byte address 0x4 - core index']
  #allocation1 [shape = 'u32[72,128]{1,0:T(1,128)}', space=vmem, size = 0x9000, scoped, tag = 'internal scratch']
  #allocation2 [shape = 's32[1]{0}', space=sflag, size = 0x4, scoped, tag = 'scoped memory for _doc_tower_gru.1']
  #allocation3 [shape = 's32[1]{0:T(128)S(6)}', space=smem, size = 0x200, scoped, tag = 'prefetched SMEM operand 0']
  %s0 = inlined_call_operand.<no memory space> [shape: s32[1], index: 0, kind: input, shape index: {}]
  %s1 = inlined_call_operand.vmem [shape: s32[1,64,1], index: 1, kind: input, shape index: {}]
  %s2 = inlined_call_operand.vmem [shape: s32[1,8,1], index: 2, kind: input, shape index: {}]
  %s3 = inlined_call_operand.hbm [shape: f32[128,384], index: 3, kind: input, shape index: {}]
  %s4 = inlined_call_operand.hbm [shape: f32[128,384], index: 4, kind: input, shape index: {}]
  %s5 = inlined_call_operand.vmem [shape: f32[1,128], index: 5, kind: input, shape index: {}]
  %s6 = inlined_call_operand.hbm [shape: f32[1,8,128], index: 6, kind: output, shape index: {}]
  %s7 = sld [smem:[#allocation0]]
  $region38: #{_doc_tower_gru.1} parent=0
    _
  %s9 = ssub.s32 1, %s7
  %s10 = scalar_select 0, %s9, %s7
  %11 = sst [smem:[#allocation3]] %s0
  $region1: #{_doc_tower_gru.1} parent=0
    #allocation4 [shape = 'u8[196608]{0}', space=vmem, size = 0x30000, scoped, tag = 'input window, operand 3, single buffered']
    #allocation5 [shape = 's32[1]{0}', space=sflag, size = 0x4, scoped, tag = 'scoped memory for _doc_tower_gru.1']
    #allocation6 [shape = 's32[1]{0}', space=sflag, size = 0x4, scoped, tag = 'scoped memory for _doc_tower_gru.1']
    #allocation7 [shape = 'u8[196608]{0}', space=vmem, size = 0x30000, scoped, tag = 'input window, operand 4, single buffered']
    #allocation8 [shape = 's32[1]{0}', space=sflag, size = 0x4, scoped, tag = 'scoped memory for _doc_tower_gru.1']
    #allocation9 [shape = 'u8[4096]{0}', space=vmem, size = 0x1000, scoped, tag = 'output window, operand 0, single buffered']
    %12 = vsyncpa [#allocation5], 0
    %13 = vsyncpa [#allocation8], 0
    %14 = vsyncpa [#allocation6], 0
    // Predicated region
    $region2: #{_doc_tower_gru.1} parent=1 // pred_check
      _
    $region3: #{_doc_tower_gru.1} parent=1 // pred_check_branch
      %16 = sbr.rel (0) target = $region5
    $region4: #{_doc_tower_gru.1} parent=1 // pred_region
      _
    $region5: #{_doc_tower_gru.1} parent=1 // pred_fallthru
      _
    // Predicated region
    $region6: #{_doc_tower_gru.1} parent=1 // pred_check
      _
    $region7: #{_doc_tower_gru.1} parent=1 // pred_check_branch
      %18 = sbr.rel (0) target = $region9
    $region8: #{_doc_tower_gru.1} parent=1 // pred_region
      _
    $region9: #{_doc_tower_gru.1} parent=1 // pred_fallthru
      _
    // Predicated region
    $region10: #{_doc_tower_gru.1} parent=1 // pred_check
      _
    $region11: #{_doc_tower_gru.1} parent=1 // pred_check_branch
      %20 = sbr.rel (0) target = $region13
    $region12: #{_doc_tower_gru.1} parent=1 // pred_region
      %22 = vsyncadd [#allocation5], 0
      %s23 = sshll.u32 %s3, 4
      %s24 = int_to_ptr.hbm [resolvable:$true] %s23
      %s25 = sshll.u32 [#allocation4], 4
      %s26 = int_to_ptr.vmem [resolvable:$true] %s25
      %31 = dma.hbm_to_vmem [thread:$0]  %s24, 6144, %s26, [#allocation5], 384, 384, 24
    $region13: #{_doc_tower_gru.1} parent=1 // pred_fallthru
      _
    // Predicated region
    $region14: #{_doc_tower_gru.1} parent=1 // pred_check
      _
    $region15: #{_doc_tower_gru.1} parent=1 // pred_check_branch
      %33 = sbr.rel (0) target = $region17
    $region16: #{_doc_tower_gru.1} parent=1 // pred_region
      %35 = vsyncadd [#allocation8], 0
      %s36 = sshll.u32 %s4, 4
      %s37 = int_to_ptr.hbm [resolvable:$true] %s36
      %s38 = sshll.u32 [#allocation7], 4
      %s39 = int_to_ptr.vmem [resolvable:$true] %s38
      %44 = dma.hbm_to_vmem [thread:$0]  %s37, 6144, %s39, [#allocation8], 384, 384, 24
    $region17: #{_doc_tower_gru.1} parent=1 // pred_fallthru
      _
    // Predicated region
    $region18: #{_doc_tower_gru.1} parent=1 // pred_check
      _
    $region19: #{_doc_tower_gru.1} parent=1 // pred_check_branch
      %46 = sbr.rel (0) target = $region21
    $region20: #{_doc_tower_gru.1} parent=1 // pred_region
      _
    $region21: #{_doc_tower_gru.1} parent=1 // pred_fallthru
      _
    // Predicated region
    $region22: #{_doc_tower_gru.1} parent=1 // pred_check
      _
    $region23: #{_doc_tower_gru.1} parent=1 // pred_check_branch
      %48 = sbr.rel (0) target = $region25
    $region24: #{_doc_tower_gru.1} parent=1 // pred_region
      %50 = dma.done [#allocation5], 6144
    $region25: #{_doc_tower_gru.1} parent=1 // pred_fallthru
      _
    // Predicated region
    $region26: #{_doc_tower_gru.1} parent=1 // pred_check
      _
    $region27: #{_doc_tower_gru.1} parent=1 // pred_check_branch
      %52 = sbr.rel (0) target = $region29
    $region28: #{_doc_tower_gru.1} parent=1 // pred_region
      %54 = dma.done [#allocation8], 6144
    $region29: #{_doc_tower_gru.1} parent=1 // pred_fallthru
      _
    %v55 = vld [vmem:[%s1] sm:$0xff]
    %v56 = vld [vmem:[%s1 + $0x8] sm:$0xff]
    %v57 = vld [vmem:[%s1 + $0x10] sm:$0xff]
    %v58 = vld [vmem:[%s1 + $0x18] sm:$0xff]
    %v59 = vld [vmem:[%s1 + $0x20] sm:$0xff]
    %v60 = vld [vmem:[%s1 + $0x28] sm:$0xff]
    %v61 = vld [vmem:[%s1 + $0x30] sm:$0xff]
    %v62 = vld [vmem:[%s1 + $0x38] sm:$0xff]
    %v63 = vld [vmem:[%s2] sm:$0xff]
    %v64 = vld [vmem:[#allocation7] sm:$0xff]
    %v65 = vld [vmem:[#allocation7 + $0x8] sm:$0xff]
    %v66 = vld [vmem:[#allocation7 + $0x10] sm:$0xff]
    %v67 = vld [vmem:[#allocation7 + $0x18] sm:$0xff]
    %v68 = vld [vmem:[#allocation7 + $0x20] sm:$0xff]
    %v69 = vld [vmem:[#allocation7 + $0x28] sm:$0xff]
    %v70 = vld [vmem:[#allocation7 + $0x30] sm:$0xff]
    %v71 = vld [vmem:[#allocation7 + $0x38] sm:$0xff]
    %v72 = vld [vmem:[#allocation7 + $0x40] sm:$0xff]
    %v73 = vld [vmem:[#allocation7 + $0x48] sm:$0xff]
    %v74 = vld [vmem:[#allocation7 + $0x50] sm:$0xff]
    %v75 = vld [vmem:[#allocation7 + $0x58] sm:$0xff]
    %v76 = vld [vmem:[#allocation7 + $0x60] sm:$0xff]
    %v77 = vld [vmem:[#allocation7 + $0x68] sm:$0xff]
    %v78 = vld [vmem:[#allocation7 + $0x70] sm:$0xff]
    %v79 = vld [vmem:[#allocation7 + $0x78] sm:$0xff]
    %v80 = vld [vmem:[#allocation7 + $0x80] sm:$0xff]
    %v81 = vld [vmem:[#allocation7 + $0x88] sm:$0xff]
    %v82 = vld [vmem:[#allocation7 + $0x90] sm:$0xff]
    %v83 = vld [vmem:[#allocation7 + $0x98] sm:$0xff]
    %v84 = vld [vmem:[#allocation7 + $0xa0] sm:$0xff]
    %v85 = vld [vmem:[#allocation7 + $0xa8] sm:$0xff]
    %v86 = vld [vmem:[#allocation7 + $0xb0] sm:$0xff]
    %v87 = vld [vmem:[#allocation7 + $0xb8] sm:$0xff]
    %v88 = vld [vmem:[#allocation7 + $0xc0] sm:$0xff]
    %v89 = vld [vmem:[#allocation7 + $0xc8] sm:$0xff]
    %v90 = vld [vmem:[#allocation7 + $0xd0] sm:$0xff]
    %v91 = vld [vmem:[#allocation7 + $0xd8] sm:$0xff]
    %v92 = vld [vmem:[#allocation7 + $0xe0] sm:$0xff]
    %v93 = vld [vmem:[#allocation7 + $0xe8] sm:$0xff]
    %v94 = vld [vmem:[#allocation7 + $0xf0] sm:$0xff]
    %v95 = vld [vmem:[#allocation7 + $0xf8] sm:$0xff]
    %v96 = vld [vmem:[#allocation7 + $0x100] sm:$0xff]
    %v97 = vld [vmem:[#allocation7 + $0x108] sm:$0xff]
    %v98 = vld [vmem:[#allocation7 + $0x110] sm:$0xff]
    %v99 = vld [vmem:[#allocation7 + $0x118] sm:$0xff]
    %v100 = vld [vmem:[#allocation7 + $0x120] sm:$0xff]
    %v101 = vld [vmem:[#allocation7 + $0x128] sm:$0xff]
    %v102 = vld [vmem:[#allocation7 + $0x130] sm:$0xff]
    %v103 = vld [vmem:[#allocation7 + $0x138] sm:$0xff]
    %v104 = vld [vmem:[#allocation7 + $0x140] sm:$0xff]
    %v105 = vld [vmem:[#allocation7 + $0x148] sm:$0xff]
    %v106 = vld [vmem:[#allocation7 + $0x150] sm:$0xff]
    %v107 = vld [vmem:[#allocation7 + $0x158] sm:$0xff]
    %v108 = vld [vmem:[#allocation7 + $0x160] sm:$0xff]
    %v109 = vld [vmem:[#allocation7 + $0x168] sm:$0xff]
    %v110 = vld [vmem:[#allocation7 + $0x170] sm:$0xff]
    %v111 = vld [vmem:[#allocation7 + $0x178] sm:$0xff]
    %v112 = vld [vmem:[%s5] sm:$0x1]
    %v113 = vlaneseq
    %v114 = vand.u32 %v113, 127
    %115 = vset.pattern.permute.xlu0 0
    %116 = vperm.xlu0 %115, %v55
    %v117 = vpop.permute.xlu0 %116
    %118 = vset.pattern.permute.xlu0 0
    %119 = vperm.xlu0 %118, %v56
    %v120 = vpop.permute.xlu0 %119
    %121 = vset.pattern.permute.xlu0 0
    %122 = vperm.xlu0 %121, %v57
    %v123 = vpop.permute.xlu0 %122
    %124 = vset.pattern.permute.xlu0 0
    %125 = vperm.xlu0 %124, %v58
    %v126 = vpop.permute.xlu0 %125
    %127 = vset.pattern.permute.xlu0 0
    %128 = vperm.xlu0 %127, %v59
    %v129 = vpop.permute.xlu0 %128
    %130 = vset.pattern.permute.xlu0 0
    %131 = vperm.xlu0 %130, %v60
    %v132 = vpop.permute.xlu0 %131
    %133 = vset.pattern.permute.xlu0 0
    %134 = vperm.xlu0 %133, %v61
    %v135 = vpop.permute.xlu0 %134
    %136 = vset.pattern.permute.xlu0 0
    %137 = vperm.xlu0 %136, %v62
    %v138 = vpop.permute.xlu0 %137
    %vm139 = vcmp.eq.s32.totalorder %v114, %v117
    %vm140 = vcmp.eq.s32.totalorder %v114, %v120
    %vm141 = vcmp.eq.s32.totalorder %v114, %v123
    %vm142 = vcmp.eq.s32.totalorder %v114, %v126
    %vm143 = vcmp.eq.s32.totalorder %v114, %v129
    %vm144 = vcmp.eq.s32.totalorder %v114, %v132
    %vm145 = vcmp.eq.s32.totalorder %v114, %v135
    %vm146 = vcmp.eq.s32.totalorder %v114, %v138
    %v147 = vsel %vm139, 1, 0
    %v148 = vsel %vm140, 1, 0
    %v149 = vsel %vm141, 1, 0
    %v150 = vsel %vm142, 1, 0
    %v151 = vsel %vm143, 1, 0
    %v152 = vsel %vm144, 1, 0
    %v153 = vsel %vm145, 1, 0
    %v154 = vsel %vm146, 1, 0
    %v155 = vcvt.s32.f32 %v147
    %v156 = vcvt.s32.f32 %v148
    %v157 = vcvt.s32.f32 %v149
    %v158 = vcvt.s32.f32 %v150
    %v159 = vcvt.s32.f32 %v151
    %v160 = vcvt.s32.f32 %v152
    %v161 = vcvt.s32.f32 %v153
    %v162 = vcvt.s32.f32 %v154
    %v163 = vld [vmem:[#allocation4] sm:$0xff]
    %v164 = vld [vmem:[#allocation4 + $0x8] sm:$0xff]
    %v165 = vld [vmem:[#allocation4 + $0x10] sm:$0xff]
    %v166 = vld [vmem:[#allocation4 + $0x18] sm:$0xff]
    %v167 = vld [vmem:[#allocation4 + $0x20] sm:$0xff]
    %v168 = vld [vmem:[#allocation4 + $0x28] sm:$0xff]
    %v169 = vld [vmem:[#allocation4 + $0x30] sm:$0xff]
    %v170 = vld [vmem:[#allocation4 + $0x38] sm:$0xff]
    %v171 = vld [vmem:[#allocation4 + $0x40] sm:$0xff]
    %v172 = vld [vmem:[#allocation4 + $0x48] sm:$0xff]
    %v173 = vld [vmem:[#allocation4 + $0x50] sm:$0xff]
    %v174 = vld [vmem:[#allocation4 + $0x58] sm:$0xff]
    %v175 = vld [vmem:[#allocation4 + $0x60] sm:$0xff]
    %v176 = vld [vmem:[#allocation4 + $0x68] sm:$0xff]
    %v177 = vld [vmem:[#allocation4 + $0x70] sm:$0xff]
    %v178 = vld [vmem:[#allocation4 + $0x78] sm:$0xff]
    %v179 = vld [vmem:[#allocation4 + $0x80] sm:$0xff]
    %v180 = vld [vmem:[#allocation4 + $0x88] sm:$0xff]
    %v181 = vld [vmem:[#allocation4 + $0x90] sm:$0xff]
    %v182 = vld [vmem:[#allocation4 + $0x98] sm:$0xff]
    %v183 = vld [vmem:[#allocation4 + $0xa0] sm:$0xff]
    %v184 = vld [vmem:[#allocation4 + $0xa8] sm:$0xff]
    %v185 = vld [vmem:[#allocation4 + $0xb0] sm:$0xff]
    %v186 = vld [vmem:[#allocation4 + $0xb8] sm:$0xff]
    %v187 = vld [vmem:[#allocation4 + $0xc0] sm:$0xff]
    %v188 = vld [vmem:[#allocation4 + $0xc8] sm:$0xff]
    %v189 = vld [vmem:[#allocation4 + $0xd0] sm:$0xff]
    %v190 = vld [vmem:[#allocation4 + $0xd8] sm:$0xff]
    %v191 = vld [vmem:[#allocation4 + $0xe0] sm:$0xff]
    %v192 = vld [vmem:[#allocation4 + $0xe8] sm:$0xff]
    %v193 = vld [vmem:[#allocation4 + $0xf0] sm:$0xff]
    %v194 = vld [vmem:[#allocation4 + $0xf8] sm:$0xff]
    %v195 = vld [vmem:[#allocation4 + $0x100] sm:$0xff]
    %v196 = vld [vmem:[#allocation4 + $0x108] sm:$0xff]
    %v197 = vld [vmem:[#allocation4 + $0x110] sm:$0xff]
    %v198 = vld [vmem:[#allocation4 + $0x118] sm:$0xff]
    %v199 = vld [vmem:[#allocation4 + $0x120] sm:$0xff]
    %v200 = vld [vmem:[#allocation4 + $0x128] sm:$0xff]
    %v201 = vld [vmem:[#allocation4 + $0x130] sm:$0xff]
    %v202 = vld [vmem:[#allocation4 + $0x138] sm:$0xff]
    %v203 = vld [vmem:[#allocation4 + $0x140] sm:$0xff]
    %v204 = vld [vmem:[#allocation4 + $0x148] sm:$0xff]
    %v205 = vld [vmem:[#allocation4 + $0x150] sm:$0xff]
    %v206 = vld [vmem:[#allocation4 + $0x158] sm:$0xff]
    %v207 = vld [vmem:[#allocation4 + $0x160] sm:$0xff]
    %v208 = vld [vmem:[#allocation4 + $0x168] sm:$0xff]
    %v209 = vld [vmem:[#allocation4 + $0x170] sm:$0xff]
    %v210 = vld [vmem:[#allocation4 + $0x178] sm:$0xff]
    %211 = vmatpush.msra.mxu0 %v208
    %212 = vmatpush.msra.mxu0 %v205
    %213 = vmatpush.msra.mxu0 %v202
    %214 = vmatpush.msra.mxu0 %v199
    %215 = vmatpush.msra.mxu0 %v196
    %216 = vmatpush.msra.mxu0 %v193
    %217 = vmatpush.msra.mxu0 %v190
    %218 = vmatpush.msra.mxu0 %v187
    %219 = vmatpush.msra.mxu0 %v184
    %220 = vmatpush.msra.mxu0 %v181
    %221 = vmatpush.msra.mxu0 %v178
    %222 = vmatpush.msra.mxu0 %v175
    %223 = vmatpush.msra.mxu0 %v172
    %224 = vmatpush.msra.mxu0 %v169
    %225 = vmatpush.msra.mxu0 %v166
    %226 = vmatpush.msra.mxu0 %v163
    %227 = vmatmul.f32.gmra.mxu0 %v155
    %v228 = vpop.f32.mrf.mxu0
    %v229 = vadd.f32 0.0, %v228
    %230 = vmatmul.f32.gmra.mxu0 %v156
    %v231 = vpop.f32.mrf.mxu0
    %v232 = vadd.f32 0.0, %v231
    %233 = vmatmul.f32.gmra.mxu0 %v157
    %v234 = vpop.f32.mrf.mxu0
    %v235 = vadd.f32 0.0, %v234
    %236 = vmatmul.f32.gmra.mxu0 %v158
    %v237 = vpop.f32.mrf.mxu0
    %v238 = vadd.f32 0.0, %v237
    %239 = vmatmul.f32.gmra.mxu0 %v159
    %v240 = vpop.f32.mrf.mxu0
    %v241 = vadd.f32 0.0, %v240
    %242 = vmatmul.f32.gmra.mxu0 %v160
    %v243 = vpop.f32.mrf.mxu0
    %v244 = vadd.f32 0.0, %v243
    %245 = vmatmul.f32.gmra.mxu0 %v161
    %v246 = vpop.f32.mrf.mxu0
    %v247 = vadd.f32 0.0, %v246
    %248 = vmatmul.f32.gmra.mxu0 %v162
    %v249 = vpop.f32.mrf.mxu0
    %v250 = vadd.f32 0.0, %v249
    %251 = vdwg.mxu0
    %252 = vmatpush.msra.mxu0 %v209
    %253 = vmatpush.msra.mxu0 %v206
    %254 = vmatpush.msra.mxu0 %v203
    %255 = vmatpush.msra.mxu0 %v200
    %256 = vmatpush.msra.mxu0 %v197
    %257 = vmatpush.msra.mxu0 %v194
    %258 = vmatpush.msra.mxu0 %v191
    %259 = vmatpush.msra.mxu0 %v188
    %260 = vmatpush.msra.mxu0 %v185
    %261 = vmatpush.msra.mxu0 %v182
    %262 = vmatpush.msra.mxu0 %v179
    %263 = vmatpush.msra.mxu0 %v176
    %264 = vmatpush.msra.mxu0 %v173
    %265 = vmatpush.msra.mxu0 %v170
    %266 = vmatpush.msra.mxu0 %v167
    %267 = vmatpush.msra.mxu0 %v164
    %268 = vmatmul.f32.gmra.mxu0 %v155
    %v269 = vpop.f32.mrf.mxu0
    %v270 = vadd.f32 0.0, %v269
    %271 = vmatmul.f32.gmra.mxu0 %v156
    %v272 = vpop.f32.mrf.mxu0
    %v273 = vadd.f32 0.0, %v272
    %274 = vmatmul.f32.gmra.mxu0 %v157
    %v275 = vpop.f32.mrf.mxu0
    %v276 = vadd.f32 0.0, %v275
    %277 = vmatmul.f32.gmra.mxu0 %v158
    %v278 = vpop.f32.mrf.mxu0
    %v279 = vadd.f32 0.0, %v278
    %280 = vmatmul.f32.gmra.mxu0 %v159
    %v281 = vpop.f32.mrf.mxu0
    %v282 = vadd.f32 0.0, %v281
    %283 = vmatmul.f32.gmra.mxu0 %v160
    %v284 = vpop.f32.mrf.mxu0
    %v285 = vadd.f32 0.0, %v284
    %286 = vmatmul.f32.gmra.mxu0 %v161
    %v287 = vpop.f32.mrf.mxu0
    %v288 = vadd.f32 0.0, %v287
    %289 = vmatmul.f32.gmra.mxu0 %v162
    %v290 = vpop.f32.mrf.mxu0
    %v291 = vadd.f32 0.0, %v290
    %292 = vdwg.mxu0
    %293 = vmatpush.msra.mxu0 %v210
    %294 = vmatpush.msra.mxu0 %v207
    %295 = vmatpush.msra.mxu0 %v204
    %296 = vmatpush.msra.mxu0 %v201
    %297 = vmatpush.msra.mxu0 %v198
    %298 = vmatpush.msra.mxu0 %v195
    %299 = vmatpush.msra.mxu0 %v192
    %300 = vmatpush.msra.mxu0 %v189
    %301 = vmatpush.msra.mxu0 %v186
    %302 = vmatpush.msra.mxu0 %v183
    %303 = vmatpush.msra.mxu0 %v180
    %304 = vmatpush.msra.mxu0 %v177
    %305 = vmatpush.msra.mxu0 %v174
    %306 = vmatpush.msra.mxu0 %v171
    %307 = vmatpush.msra.mxu0 %v168
    %308 = vmatpush.msra.mxu0 %v165
    %309 = vmatmul.f32.gmra.mxu0 %v155
    %v310 = vpop.f32.mrf.mxu0
    %v311 = vadd.f32 0.0, %v310
    %312 = vmatmul.f32.gmra.mxu0 %v156
    %v313 = vpop.f32.mrf.mxu0
    %v314 = vadd.f32 0.0, %v313
    %315 = vmatmul.f32.gmra.mxu0 %v157
    %v316 = vpop.f32.mrf.mxu0
    %v317 = vadd.f32 0.0, %v316
    %318 = vmatmul.f32.gmra.mxu0 %v158
    %v319 = vpop.f32.mrf.mxu0
    %v320 = vadd.f32 0.0, %v319
    %321 = vmatmul.f32.gmra.mxu0 %v159
    %v322 = vpop.f32.mrf.mxu0
    %v323 = vadd.f32 0.0, %v322
    %324 = vmatmul.f32.gmra.mxu0 %v160
    %v325 = vpop.f32.mrf.mxu0
    %v326 = vadd.f32 0.0, %v325
    %327 = vmatmul.f32.gmra.mxu0 %v161
    %v328 = vpop.f32.mrf.mxu0
    %v329 = vadd.f32 0.0, %v328
    %330 = vmatmul.f32.gmra.mxu0 %v162
    %v331 = vpop.f32.mrf.mxu0
    %v332 = vadd.f32 0.0, %v331
    %333 = vdwg.mxu0
    %vm334 = vcmp.gt.s32.totalorder %v63, 0
    %335 = vmatpush.msra.mxu0 %v109
    %336 = vmatpush.msra.mxu0 %v106
    %337 = vmatpush.msra.mxu0 %v103
    %338 = vmatpush.msra.mxu0 %v100
    %339 = vmatpush.msra.mxu0 %v97
    %340 = vmatpush.msra.mxu0 %v94
    %341 = vmatpush.msra.mxu0 %v91
    %342 = vmatpush.msra.mxu0 %v88
    %343 = vmatpush.msra.mxu0 %v85
    %344 = vmatpush.msra.mxu0 %v82
    %345 = vmatpush.msra.mxu0 %v79
    %346 = vmatpush.msra.mxu0 %v76
    %347 = vmatpush.msra.mxu0 %v73
    %348 = vmatpush.msra.mxu0 %v70
    %349 = vmatpush.msra.mxu0 %v67
    %350 = vmatpush.msra.mxu0 %v64
    %351 = vmatmul.f32.gmra.mxu0 0.0
    %v352 = vpop.f32.mrf.mxu0
    %v353 = vadd.f32 0.0, %v352
    %354 = vdwg.mxu0
    %355 = vmatpush.msra.mxu0 %v110
    %356 = vmatpush.msra.mxu0 %v107
    %357 = vmatpush.msra.mxu0 %v104
    %358 = vmatpush.msra.mxu0 %v101
    %359 = vmatpush.msra.mxu0 %v98
    %360 = vmatpush.msra.mxu0 %v95
    %361 = vmatpush.msra.mxu0 %v92
    %362 = vmatpush.msra.mxu0 %v89
    %363 = vmatpush.msra.mxu0 %v86
    %364 = vmatpush.msra.mxu0 %v83
    %365 = vmatpush.msra.mxu0 %v80
    %366 = vmatpush.msra.mxu0 %v77
    %367 = vmatpush.msra.mxu0 %v74
    %368 = vmatpush.msra.mxu0 %v71
    %369 = vmatpush.msra.mxu0 %v68
    %370 = vmatpush.msra.mxu0 %v65
    %371 = vmatmul.f32.gmra.mxu0 0.0
    %v372 = vpop.f32.mrf.mxu0
    %v373 = vadd.f32 0.0, %v372
    %374 = vdwg.mxu0
    %375 = vmatpush.msra.mxu0 %v111
    %376 = vmatpush.msra.mxu0 %v108
    %377 = vmatpush.msra.mxu0 %v105
    %378 = vmatpush.msra.mxu0 %v102
    %379 = vmatpush.msra.mxu0 %v99
    %380 = vmatpush.msra.mxu0 %v96
    %381 = vmatpush.msra.mxu0 %v93
    %382 = vmatpush.msra.mxu0 %v90
    %383 = vmatpush.msra.mxu0 %v87
    %384 = vmatpush.msra.mxu0 %v84
    %385 = vmatpush.msra.mxu0 %v81
    %386 = vmatpush.msra.mxu0 %v78
    %387 = vmatpush.msra.mxu0 %v75
    %388 = vmatpush.msra.mxu0 %v72
    %389 = vmatpush.msra.mxu0 %v69
    %390 = vmatpush.msra.mxu0 %v66
    %391 = vmatmul.f32.gmra.mxu0 0.0
    %v392 = vpop.f32.mrf.mxu0
    %v393 = vadd.f32 0.0, %v392
    %394 = vdwg.mxu0
    %v395 = vadd.f32 %v229, %v353
    %v396 = vxor.u32 %v395, 2147483648
    %v397 = vmul.f32 %v396, 1.442695
    %v398 = vpow.pop %v397
    %v399 = vadd.f32 %v398, 1.0
    %v400 = vrcp.pop %v399
    %v401 = vmul.f32 %v399, %v400
    %v402 = vsub.f32 1.0, %v401
    %v403 = vmul.f32 %v400, %v402
    %v404 = vadd.f32 %v400, %v403
    %vm405 = vweird.f32 %v399
    %vm406 = vweird.f32 %v400
    %vm407 = vmor %vm405, %vm406
    %v408 = vsel %vm407, %v400, %v404
    %v409 = vand.u32 2147483647, %v399
    %vm410 = vcmp.eq.f32.partialorder %v409, 8.507059e+37
    %v411 = vand.u32 %v399, 2147483648
    %v412 = vor.u32 1.1754944e-38, %v411
    %v413 = vsel %vm410, %v412, %v408
    %v414 = vmul.f32 1.0, %v413
    %v415 = vadd.f32 %v270, %v373
    %v416 = vxor.u32 %v415, 2147483648
    %v417 = vmul.f32 %v416, 1.442695
    %v418 = vpow.pop %v417
    %v419 = vadd.f32 %v418, 1.0
    %v420 = vrcp.pop %v419
    %v421 = vmul.f32 %v419, %v420
    %v422 = vsub.f32 1.0, %v421
    %v423 = vmul.f32 %v420, %v422
    %v424 = vadd.f32 %v420, %v423
    %vm425 = vweird.f32 %v419
    %vm426 = vweird.f32 %v420
    %vm427 = vmor %vm425, %vm426
    %v428 = vsel %vm427, %v420, %v424
    %v429 = vand.u32 2147483647, %v419
    %vm430 = vcmp.eq.f32.partialorder %v429, 8.507059e+37
    %v431 = vand.u32 %v419, 2147483648
    %v432 = vor.u32 1.1754944e-38, %v431
    %v433 = vsel %vm430, %v432, %v428
    %v434 = vmul.f32 1.0, %v433
    %v436 = vperm.slane %v112, 0
    %v438 = vadd.f32 %v393, %v436
    %v439 = vmul.f32 %v414, %v438
    %v440 = vadd.f32 %v311, %v439
    %v441 = vtanh.pop %v440
    %v442 = vsub.f32 1.0, %v434
    %v443 = vmul.f32 %v442, %v441
    %v444 = vmul.f32 %v434, 0.0
    %v445 = vadd.f32 %v443, %v444
    %v446 = vsel %vm334, 1, 0
    %447 = vset.pattern.permute.xlu0 0
    %448 = vperm.xlu0 %447, %v446
    %v449 = vpop.permute.xlu0 %448
    %vm450 = vcmp.eq.s32.totalorder %v449, 1
    %v451 = vsel %vm450, %v445, 0.0
    %vm452 = vcmp.gt.s32.totalorder %v63, 1
    %453 = vmatpush.msra.mxu0 %v109
    %454 = vmatpush.msra.mxu0 %v106
    %455 = vmatpush.msra.mxu0 %v103
    %456 = vmatpush.msra.mxu0 %v100
    %457 = vmatpush.msra.mxu0 %v97
    %458 = vmatpush.msra.mxu0 %v94
    %459 = vmatpush.msra.mxu0 %v91
    %460 = vmatpush.msra.mxu0 %v88
    %461 = vmatpush.msra.mxu0 %v85
    %462 = vmatpush.msra.mxu0 %v82
    %463 = vmatpush.msra.mxu0 %v79
    %464 = vmatpush.msra.mxu0 %v76
    %465 = vmatpush.msra.mxu0 %v73
    %466 = vmatpush.msra.mxu0 %v70
    %467 = vmatpush.msra.mxu0 %v67
    %468 = vmatpush.msra.mxu0 %v64
    %469 = vmatmul.f32.gmra.mxu0 %v451
    %v470 = vpop.f32.mrf.mxu0
    %v471 = vadd.f32 0.0, %v470
    %472 = vdwg.mxu0
    %473 = vmatpush.msra.mxu0 %v110
    %474 = vmatpush.msra.mxu0 %v107
    %475 = vmatpush.msra.mxu0 %v104
    %476 = vmatpush.msra.mxu0 %v101
    %477 = vmatpush.msra.mxu0 %v98
    %478 = vmatpush.msra.mxu0 %v95
    %479 = vmatpush.msra.mxu0 %v92
    %480 = vmatpush.msra.mxu0 %v89
    %481 = vmatpush.msra.mxu0 %v86
    %482 = vmatpush.msra.mxu0 %v83
    %483 = vmatpush.msra.mxu0 %v80
    %484 = vmatpush.msra.mxu0 %v77
    %485 = vmatpush.msra.mxu0 %v74
    %486 = vmatpush.msra.mxu0 %v71
    %487 = vmatpush.msra.mxu0 %v68
    %488 = vmatpush.msra.mxu0 %v65
    %489 = vmatmul.f32.gmra.mxu0 %v451
    %v490 = vpop.f32.mrf.mxu0
    %v491 = vadd.f32 0.0, %v490
    %492 = vdwg.mxu0
    %493 = vmatpush.msra.mxu0 %v111
    %494 = vmatpush.msra.mxu0 %v108
    %495 = vmatpush.msra.mxu0 %v105
    %496 = vmatpush.msra.mxu0 %v102
    %497 = vmatpush.msra.mxu0 %v99
    %498 = vmatpush.msra.mxu0 %v96
    %499 = vmatpush.msra.mxu0 %v93
    %500 = vmatpush.msra.mxu0 %v90
    %501 = vmatpush.msra.mxu0 %v87
    %502 = vmatpush.msra.mxu0 %v84
    %503 = vmatpush.msra.mxu0 %v81
    %504 = vmatpush.msra.mxu0 %v78
    %505 = vmatpush.msra.mxu0 %v75
    %506 = vmatpush.msra.mxu0 %v72
    %507 = vmatpush.msra.mxu0 %v69
    %508 = vmatpush.msra.mxu0 %v66
    %509 = vmatmul.f32.gmra.mxu0 %v451
    %v510 = vpop.f32.mrf.mxu0
    %v511 = vadd.f32 0.0, %v510
    %512 = vdwg.mxu0
    %v513 = vadd.f32 %v232, %v471
    %v514 = vxor.u32 %v513, 2147483648
    %v515 = vmul.f32 %v514, 1.442695
    %v516 = vpow.pop %v515
    %v517 = vadd.f32 %v516, 1.0
    %v518 = vrcp.pop %v517
    %v519 = vmul.f32 %v517, %v518
    %v520 = vsub.f32 1.0, %v519
    %v521 = vmul.f32 %v518, %v520
    %v522 = vadd.f32 %v518, %v521
    %vm523 = vweird.f32 %v517
    %vm524 = vweird.f32 %v518
    %vm525 = vmor %vm523, %vm524
    %v526 = vsel %vm525, %v518, %v522
    %v527 = vand.u32 2147483647, %v517
    %vm528 = vcmp.eq.f32.partialorder %v527, 8.507059e+37
    %v529 = vand.u32 %v517, 2147483648
    %v530 = vor.u32 1.1754944e-38, %v529
    %v531 = vsel %vm528, %v530, %v526
    %v532 = vmul.f32 1.0, %v531
    %v533 = vadd.f32 %v273, %v491
    %v534 = vxor.u32 %v533, 2147483648
    %v535 = vmul.f32 %v534, 1.442695
    %v536 = vpow.pop %v535
    %v537 = vadd.f32 %v536, 1.0
    %v538 = vrcp.pop %v537
    %v539 = vmul.f32 %v537, %v538
    %v540 = vsub.f32 1.0, %v539
    %v541 = vmul.f32 %v538, %v540
    %v542 = vadd.f32 %v538, %v541
    %vm543 = vweird.f32 %v537
    %vm544 = vweird.f32 %v538
    %vm545 = vmor %vm543, %vm544
    %v546 = vsel %vm545, %v538, %v542
    %v547 = vand.u32 2147483647, %v537
    %vm548 = vcmp.eq.f32.partialorder %v547, 8.507059e+37
    %v549 = vand.u32 %v537, 2147483648
    %v550 = vor.u32 1.1754944e-38, %v549
    %v551 = vsel %vm548, %v550, %v546
    %v552 = vmul.f32 1.0, %v551
    %v553 = vadd.f32 %v511, %v436
    %v554 = vmul.f32 %v532, %v553
    %v555 = vadd.f32 %v314, %v554
    %v556 = vtanh.pop %v555
    %v557 = vsub.f32 1.0, %v552
    %v558 = vmul.f32 %v557, %v556
    %v559 = vmul.f32 %v552, %v451
    %v560 = vadd.f32 %v558, %v559
    %v561 = vsel %vm452, 1, 0
    %562 = vset.pattern.permute.xlu0 0
    %563 = vperm.xlu0 %562, %v561
    %v564 = vpop.permute.xlu0 %563
    %vm565 = vcmp.eq.s32.totalorder %v564, 1
    %v566 = vsel %vm565, %v560, %v451
    %vm567 = vcmp.gt.s32.totalorder %v63, 2
    %568 = vmatpush.msra.mxu0 %v109
    %569 = vmatpush.msra.mxu0 %v106
    %570 = vmatpush.msra.mxu0 %v103
    %571 = vmatpush.msra.mxu0 %v100
    %572 = vmatpush.msra.mxu0 %v97
    %573 = vmatpush.msra.mxu0 %v94
    %574 = vmatpush.msra.mxu0 %v91
    %575 = vmatpush.msra.mxu0 %v88
    %576 = vmatpush.msra.mxu0 %v85
    %577 = vmatpush.msra.mxu0 %v82
    %578 = vmatpush.msra.mxu0 %v79
    %579 = vmatpush.msra.mxu0 %v76
    %580 = vmatpush.msra.mxu0 %v73
    %581 = vmatpush.msra.mxu0 %v70
    %582 = vmatpush.msra.mxu0 %v67
    %583 = vmatpush.msra.mxu0 %v64
    %584 = vmatmul.f32.gmra.mxu0 %v566
    %v585 = vpop.f32.mrf.mxu0
    %v586 = vadd.f32 0.0, %v585
    %587 = vdwg.mxu0
    %588 = vmatpush.msra.mxu0 %v110
    %589 = vmatpush.msra.mxu0 %v107
    %590 = vmatpush.msra.mxu0 %v104
    %591 = vmatpush.msra.mxu0 %v101
    %592 = vmatpush.msra.mxu0 %v98
    %593 = vmatpush.msra.mxu0 %v95
    %594 = vmatpush.msra.mxu0 %v92
    %595 = vmatpush.msra.mxu0 %v89
    %596 = vmatpush.msra.mxu0 %v86
    %597 = vmatpush.msra.mxu0 %v83
    %598 = vmatpush.msra.mxu0 %v80
    %599 = vmatpush.msra.mxu0 %v77
    %600 = vmatpush.msra.mxu0 %v74
    %601 = vmatpush.msra.mxu0 %v71
    %602 = vmatpush.msra.mxu0 %v68
    %603 = vmatpush.msra.mxu0 %v65
    %604 = vmatmul.f32.gmra.mxu0 %v566
    %v605 = vpop.f32.mrf.mxu0
    %v606 = vadd.f32 0.0, %v605
    %607 = vdwg.mxu0
    %608 = vmatpush.msra.mxu0 %v111
    %609 = vmatpush.msra.mxu0 %v108
    %610 = vmatpush.msra.mxu0 %v105
    %611 = vmatpush.msra.mxu0 %v102
    %612 = vmatpush.msra.mxu0 %v99
    %613 = vmatpush.msra.mxu0 %v96
    %614 = vmatpush.msra.mxu0 %v93
    %615 = vmatpush.msra.mxu0 %v90
    %616 = vmatpush.msra.mxu0 %v87
    %617 = vmatpush.msra.mxu0 %v84
    %618 = vmatpush.msra.mxu0 %v81
    %619 = vmatpush.msra.mxu0 %v78
    %620 = vmatpush.msra.mxu0 %v75
    %621 = vmatpush.msra.mxu0 %v72
    %622 = vmatpush.msra.mxu0 %v69
    %623 = vmatpush.msra.mxu0 %v66
    %624 = vmatmul.f32.gmra.mxu0 %v566
    %v625 = vpop.f32.mrf.mxu0
    %v626 = vadd.f32 0.0, %v625
    %627 = vdwg.mxu0
    %v628 = vadd.f32 %v235, %v586
    %v629 = vxor.u32 %v628, 2147483648
    %v630 = vmul.f32 %v629, 1.442695
    %v631 = vpow.pop %v630
    %v632 = vadd.f32 %v631, 1.0
    %v633 = vrcp.pop %v632
    %v634 = vmul.f32 %v632, %v633
    %v635 = vsub.f32 1.0, %v634
    %v636 = vmul.f32 %v633, %v635
    %v637 = vadd.f32 %v633, %v636
    %vm638 = vweird.f32 %v632
    %vm639 = vweird.f32 %v633
    %vm640 = vmor %vm638, %vm639
    %v641 = vsel %vm640, %v633, %v637
    %v642 = vand.u32 2147483647, %v632
    %vm643 = vcmp.eq.f32.partialorder %v642, 8.507059e+37
    %v644 = vand.u32 %v632, 2147483648
    %v645 = vor.u32 1.1754944e-38, %v644
    %v646 = vsel %vm643, %v645, %v641
    %v647 = vmul.f32 1.0, %v646
    %v648 = vadd.f32 %v276, %v606
    %v649 = vxor.u32 %v648, 2147483648
    %v650 = vmul.f32 %v649, 1.442695
    %v651 = vpow.pop %v650
    %v652 = vadd.f32 %v651, 1.0
    %v653 = vrcp.pop %v652
    %v654 = vmul.f32 %v652, %v653
    %v655 = vsub.f32 1.0, %v654
    %v656 = vmul.f32 %v653, %v655
    %v657 = vadd.f32 %v653, %v656
    %vm658 = vweird.f32 %v652
    %vm659 = vweird.f32 %v653
    %vm660 = vmor %vm658, %vm659
    %v661 = vsel %vm660, %v653, %v657
    %v662 = vand.u32 2147483647, %v652
    %vm663 = vcmp.eq.f32.partialorder %v662, 8.507059e+37
    %v664 = vand.u32 %v652, 2147483648
    %v665 = vor.u32 1.1754944e-38, %v664
    %v666 = vsel %vm663, %v665, %v661
    %v667 = vmul.f32 1.0, %v666
    %v668 = vadd.f32 %v626, %v436
    %v669 = vmul.f32 %v647, %v668
    %v670 = vadd.f32 %v317, %v669
    %v671 = vtanh.pop %v670
    %v672 = vsub.f32 1.0, %v667
    %v673 = vmul.f32 %v672, %v671
    %v674 = vmul.f32 %v667, %v566
    %v675 = vadd.f32 %v673, %v674
    %v676 = vsel %vm567, 1, 0
    %677 = vset.pattern.permute.xlu0 0
    %678 = vperm.xlu0 %677, %v676
    %v679 = vpop.permute.xlu0 %678
    %vm680 = vcmp.eq.s32.totalorder %v679, 1
    %v681 = vsel %vm680, %v675, %v566
    %vm682 = vcmp.gt.s32.totalorder %v63, 3
    %683 = vmatpush.msra.mxu0 %v109
    %684 = vmatpush.msra.mxu0 %v106
    %685 = vmatpush.msra.mxu0 %v103
    %686 = vmatpush.msra.mxu0 %v100
    %687 = vmatpush.msra.mxu0 %v97
    %688 = vmatpush.msra.mxu0 %v94
    %689 = vmatpush.msra.mxu0 %v91
    %690 = vmatpush.msra.mxu0 %v88
    %691 = vmatpush.msra.mxu0 %v85
    %692 = vmatpush.msra.mxu0 %v82
    %693 = vmatpush.msra.mxu0 %v79
    %694 = vmatpush.msra.mxu0 %v76
    %695 = vmatpush.msra.mxu0 %v73
    %696 = vmatpush.msra.mxu0 %v70
    %697 = vmatpush.msra.mxu0 %v67
    %698 = vmatpush.msra.mxu0 %v64
    %699 = vmatmul.f32.gmra.mxu0 %v681
    %v700 = vpop.f32.mrf.mxu0
    %v701 = vadd.f32 0.0, %v700
    %702 = vdwg.mxu0
    %703 = vmatpush.msra.mxu0 %v110
    %704 = vmatpush.msra.mxu0 %v107
    %705 = vmatpush.msra.mxu0 %v104
    %706 = vmatpush.msra.mxu0 %v101
    %707 = vmatpush.msra.mxu0 %v98
    %708 = vmatpush.msra.mxu0 %v95
    %709 = vmatpush.msra.mxu0 %v92
    %710 = vmatpush.msra.mxu0 %v89
    %711 = vmatpush.msra.mxu0 %v86
    %712 = vmatpush.msra.mxu0 %v83
    %713 = vmatpush.msra.mxu0 %v80
    %714 = vmatpush.msra.mxu0 %v77
    %715 = vmatpush.msra.mxu0 %v74
    %716 = vmatpush.msra.mxu0 %v71
    %717 = vmatpush.msra.mxu0 %v68
    %718 = vmatpush.msra.mxu0 %v65
    %719 = vmatmul.f32.gmra.mxu0 %v681
    %v720 = vpop.f32.mrf.mxu0
    %v721 = vadd.f32 0.0, %v720
    %722 = vdwg.mxu0
    %723 = vmatpush.msra.mxu0 %v111
    %724 = vmatpush.msra.mxu0 %v108
    %725 = vmatpush.msra.mxu0 %v105
    %726 = vmatpush.msra.mxu0 %v102
    %727 = vmatpush.msra.mxu0 %v99
    %728 = vmatpush.msra.mxu0 %v96
    %729 = vmatpush.msra.mxu0 %v93
    %730 = vmatpush.msra.mxu0 %v90
    %731 = vmatpush.msra.mxu0 %v87
    %732 = vmatpush.msra.mxu0 %v84
    %733 = vmatpush.msra.mxu0 %v81
    %734 = vmatpush.msra.mxu0 %v78
    %735 = vmatpush.msra.mxu0 %v75
    %736 = vmatpush.msra.mxu0 %v72
    %737 = vmatpush.msra.mxu0 %v69
    %738 = vmatpush.msra.mxu0 %v66
    %739 = vmatmul.f32.gmra.mxu0 %v681
    %v740 = vpop.f32.mrf.mxu0
    %v741 = vadd.f32 0.0, %v740
    %742 = vdwg.mxu0
    %v743 = vadd.f32 %v238, %v701
    %v744 = vxor.u32 %v743, 2147483648
    %v745 = vmul.f32 %v744, 1.442695
    %v746 = vpow.pop %v745
    %v747 = vadd.f32 %v746, 1.0
    %v748 = vrcp.pop %v747
    %v749 = vmul.f32 %v747, %v748
    %v750 = vsub.f32 1.0, %v749
    %v751 = vmul.f32 %v748, %v750
    %v752 = vadd.f32 %v748, %v751
    %vm753 = vweird.f32 %v747
    %vm754 = vweird.f32 %v748
    %vm755 = vmor %vm753, %vm754
    %v756 = vsel %vm755, %v748, %v752
    %v757 = vand.u32 2147483647, %v747
    %vm758 = vcmp.eq.f32.partialorder %v757, 8.507059e+37
    %v759 = vand.u32 %v747, 2147483648
    %v760 = vor.u32 1.1754944e-38, %v759
    %v761 = vsel %vm758, %v760, %v756
    %v762 = vmul.f32 1.0, %v761
    %v763 = vadd.f32 %v279, %v721
    %v764 = vxor.u32 %v763, 2147483648
    %v765 = vmul.f32 %v764, 1.442695
    %v766 = vpow.pop %v765
    %v767 = vadd.f32 %v766, 1.0
    %v768 = vrcp.pop %v767
    %v769 = vmul.f32 %v767, %v768
    %v770 = vsub.f32 1.0, %v769
    %v771 = vmul.f32 %v768, %v770
    %v772 = vadd.f32 %v768, %v771
    %vm773 = vweird.f32 %v767
    %vm774 = vweird.f32 %v768
    %vm775 = vmor %vm773, %vm774
    %v776 = vsel %vm775, %v768, %v772
    %v777 = vand.u32 2147483647, %v767
    %vm778 = vcmp.eq.f32.partialorder %v777, 8.507059e+37
    %v779 = vand.u32 %v767, 2147483648
    %v780 = vor.u32 1.1754944e-38, %v779
    %v781 = vsel %vm778, %v780, %v776
    %v782 = vmul.f32 1.0, %v781
    %v783 = vadd.f32 %v741, %v436
    %v784 = vmul.f32 %v762, %v783
    %v785 = vadd.f32 %v320, %v784
    %v786 = vtanh.pop %v785
    %v787 = vsub.f32 1.0, %v782
    %v788 = vmul.f32 %v787, %v786
    %v789 = vmul.f32 %v782, %v681
    %v790 = vadd.f32 %v788, %v789
    %v791 = vsel %vm682, 1, 0
    %792 = vset.pattern.permute.xlu0 0
    %793 = vperm.xlu0 %792, %v791
    %v794 = vpop.permute.xlu0 %793
    %vm795 = vcmp.eq.s32.totalorder %v794, 1
    %v796 = vsel %vm795, %v790, %v681
    %vm797 = vcmp.gt.s32.totalorder %v63, 4
    %798 = vmatpush.msra.mxu0 %v109
    %799 = vmatpush.msra.mxu0 %v106
    %800 = vmatpush.msra.mxu0 %v103
    %801 = vmatpush.msra.mxu0 %v100
    %802 = vmatpush.msra.mxu0 %v97
    %803 = vmatpush.msra.mxu0 %v94
    %804 = vmatpush.msra.mxu0 %v91
    %805 = vmatpush.msra.mxu0 %v88
    %806 = vmatpush.msra.mxu0 %v85
    %807 = vmatpush.msra.mxu0 %v82
    %808 = vmatpush.msra.mxu0 %v79
    %809 = vmatpush.msra.mxu0 %v76
    %810 = vmatpush.msra.mxu0 %v73
    %811 = vmatpush.msra.mxu0 %v70
    %812 = vmatpush.msra.mxu0 %v67
    %813 = vmatpush.msra.mxu0 %v64
    %814 = vmatmul.f32.gmra.mxu0 %v796
    %v815 = vpop.f32.mrf.mxu0
    %v816 = vadd.f32 0.0, %v815
    %817 = vdwg.mxu0
    %818 = vmatpush.msra.mxu0 %v110
    %819 = vmatpush.msra.mxu0 %v107
    %820 = vmatpush.msra.mxu0 %v104
    %821 = vmatpush.msra.mxu0 %v101
    %822 = vmatpush.msra.mxu0 %v98
    %823 = vmatpush.msra.mxu0 %v95
    %824 = vmatpush.msra.mxu0 %v92
    %825 = vmatpush.msra.mxu0 %v89
    %826 = vmatpush.msra.mxu0 %v86
    %827 = vmatpush.msra.mxu0 %v83
    %828 = vmatpush.msra.mxu0 %v80
    %829 = vmatpush.msra.mxu0 %v77
    %830 = vmatpush.msra.mxu0 %v74
    %831 = vmatpush.msra.mxu0 %v71
    %832 = vmatpush.msra.mxu0 %v68
    %833 = vmatpush.msra.mxu0 %v65
    %834 = vmatmul.f32.gmra.mxu0 %v796
    %v835 = vpop.f32.mrf.mxu0
    %v836 = vadd.f32 0.0, %v835
    %837 = vdwg.mxu0
    %838 = vmatpush.msra.mxu0 %v111
    %839 = vmatpush.msra.mxu0 %v108
    %840 = vmatpush.msra.mxu0 %v105
    %841 = vmatpush.msra.mxu0 %v102
    %842 = vmatpush.msra.mxu0 %v99
    %843 = vmatpush.msra.mxu0 %v96
    %844 = vmatpush.msra.mxu0 %v93
    %845 = vmatpush.msra.mxu0 %v90
    %846 = vmatpush.msra.mxu0 %v87
    %847 = vmatpush.msra.mxu0 %v84
    %848 = vmatpush.msra.mxu0 %v81
    %849 = vmatpush.msra.mxu0 %v78
    %850 = vmatpush.msra.mxu0 %v75
    %851 = vmatpush.msra.mxu0 %v72
    %852 = vmatpush.msra.mxu0 %v69
    %853 = vmatpush.msra.mxu0 %v66
    %854 = vmatmul.f32.gmra.mxu0 %v796
    %v855 = vpop.f32.mrf.mxu0
    %v856 = vadd.f32 0.0, %v855
    %857 = vdwg.mxu0
    %v858 = vadd.f32 %v241, %v816
    %v859 = vxor.u32 %v858, 2147483648
    %v860 = vmul.f32 %v859, 1.442695
    %v861 = vpow.pop %v860
    %v862 = vadd.f32 %v861, 1.0
    %v863 = vrcp.pop %v862
    %v864 = vmul.f32 %v862, %v863
    %v865 = vsub.f32 1.0, %v864
    %v866 = vmul.f32 %v863, %v865
    %v867 = vadd.f32 %v863, %v866
    %vm868 = vweird.f32 %v862
    %vm869 = vweird.f32 %v863
    %vm870 = vmor %vm868, %vm869
    %v871 = vsel %vm870, %v863, %v867
    %v872 = vand.u32 2147483647, %v862
    %vm873 = vcmp.eq.f32.partialorder %v872, 8.507059e+37
    %v874 = vand.u32 %v862, 2147483648
    %v875 = vor.u32 1.1754944e-38, %v874
    %v876 = vsel %vm873, %v875, %v871
    %v877 = vmul.f32 1.0, %v876
    %v878 = vadd.f32 %v282, %v836
    %v879 = vxor.u32 %v878, 2147483648
    %v880 = vmul.f32 %v879, 1.442695
    %v881 = vpow.pop %v880
    %v882 = vadd.f32 %v881, 1.0
    %v883 = vrcp.pop %v882
    %v884 = vmul.f32 %v882, %v883
    %v885 = vsub.f32 1.0, %v884
    %v886 = vmul.f32 %v883, %v885
    %v887 = vadd.f32 %v883, %v886
    %vm888 = vweird.f32 %v882
    %vm889 = vweird.f32 %v883
    %vm890 = vmor %vm888, %vm889
    %v891 = vsel %vm890, %v883, %v887
    %v892 = vand.u32 2147483647, %v882
    %vm893 = vcmp.eq.f32.partialorder %v892, 8.507059e+37
    %v894 = vand.u32 %v882, 2147483648
    %v895 = vor.u32 1.1754944e-38, %v894
    %v896 = vsel %vm893, %v895, %v891
    %v897 = vmul.f32 1.0, %v896
    %v898 = vadd.f32 %v856, %v436
    %v899 = vmul.f32 %v877, %v898
    %v900 = vadd.f32 %v323, %v899
    %v901 = vtanh.pop %v900
    %v902 = vsub.f32 1.0, %v897
    %v903 = vmul.f32 %v902, %v901
    %v904 = vmul.f32 %v897, %v796
    %v905 = vadd.f32 %v903, %v904
    %v906 = vsel %vm797, 1, 0
    %907 = vset.pattern.permute.xlu0 0
    %908 = vperm.xlu0 %907, %v906
    %v909 = vpop.permute.xlu0 %908
    %vm910 = vcmp.eq.s32.totalorder %v909, 1
    %v911 = vsel %vm910, %v905, %v796
    %vm912 = vcmp.gt.s32.totalorder %v63, 5
    %913 = vmatpush.msra.mxu0 %v109
    %914 = vmatpush.msra.mxu0 %v106
    %915 = vmatpush.msra.mxu0 %v103
    %916 = vmatpush.msra.mxu0 %v100
    %917 = vmatpush.msra.mxu0 %v97
    %918 = vmatpush.msra.mxu0 %v94
    %919 = vmatpush.msra.mxu0 %v91
    %920 = vmatpush.msra.mxu0 %v88
    %921 = vmatpush.msra.mxu0 %v85
    %922 = vmatpush.msra.mxu0 %v82
    %923 = vmatpush.msra.mxu0 %v79
    %924 = vmatpush.msra.mxu0 %v76
    %925 = vmatpush.msra.mxu0 %v73
    %926 = vmatpush.msra.mxu0 %v70
    %927 = vmatpush.msra.mxu0 %v67
    %928 = vmatpush.msra.mxu0 %v64
    %929 = vmatmul.f32.gmra.mxu0 %v911
    %v930 = vpop.f32.mrf.mxu0
    %v931 = vadd.f32 0.0, %v930
    %932 = vdwg.mxu0
    %933 = vmatpush.msra.mxu0 %v110
    %934 = vmatpush.msra.mxu0 %v107
    %935 = vmatpush.msra.mxu0 %v104
    %936 = vmatpush.msra.mxu0 %v101
    %937 = vmatpush.msra.mxu0 %v98
    %938 = vmatpush.msra.mxu0 %v95
    %939 = vmatpush.msra.mxu0 %v92
    %940 = vmatpush.msra.mxu0 %v89
    %941 = vmatpush.msra.mxu0 %v86
    %942 = vmatpush.msra.mxu0 %v83
    %943 = vmatpush.msra.mxu0 %v80
    %944 = vmatpush.msra.mxu0 %v77
    %945 = vmatpush.msra.mxu0 %v74
    %946 = vmatpush.msra.mxu0 %v71
    %947 = vmatpush.msra.mxu0 %v68
    %948 = vmatpush.msra.mxu0 %v65
    %949 = vmatmul.f32.gmra.mxu0 %v911
    %v950 = vpop.f32.mrf.mxu0
    %v951 = vadd.f32 0.0, %v950
    %952 = vdwg.mxu0
    %953 = vmatpush.msra.mxu0 %v111
    %954 = vmatpush.msra.mxu0 %v108
    %955 = vmatpush.msra.mxu0 %v105
    %956 = vmatpush.msra.mxu0 %v102
    %957 = vmatpush.msra.mxu0 %v99
    %958 = vmatpush.msra.mxu0 %v96
    %959 = vmatpush.msra.mxu0 %v93
    %960 = vmatpush.msra.mxu0 %v90
    %961 = vmatpush.msra.mxu0 %v87
    %962 = vmatpush.msra.mxu0 %v84
    %963 = vmatpush.msra.mxu0 %v81
    %964 = vmatpush.msra.mxu0 %v78
    %965 = vmatpush.msra.mxu0 %v75
    %966 = vmatpush.msra.mxu0 %v72
    %967 = vmatpush.msra.mxu0 %v69
    %968 = vmatpush.msra.mxu0 %v66
    %969 = vmatmul.f32.gmra.mxu0 %v911
    %v970 = vpop.f32.mrf.mxu0
    %v971 = vadd.f32 0.0, %v970
    %972 = vdwg.mxu0
    %v973 = vadd.f32 %v244, %v931
    %v974 = vxor.u32 %v973, 2147483648
    %v975 = vmul.f32 %v974, 1.442695
    %v976 = vpow.pop %v975
    %v977 = vadd.f32 %v976, 1.0
    %v978 = vrcp.pop %v977
    %v979 = vmul.f32 %v977, %v978
    %v980 = vsub.f32 1.0, %v979
    %v981 = vmul.f32 %v978, %v980
    %v982 = vadd.f32 %v978, %v981
    %vm983 = vweird.f32 %v977
    %vm984 = vweird.f32 %v978
    %vm985 = vmor %vm983, %vm984
    %v986 = vsel %vm985, %v978, %v982
    %v987 = vand.u32 2147483647, %v977
    %vm988 = vcmp.eq.f32.partialorder %v987, 8.507059e+37
    %v989 = vand.u32 %v977, 2147483648
    %v990 = vor.u32 1.1754944e-38, %v989
    %v991 = vsel %vm988, %v990, %v986
    %v992 = vmul.f32 1.0, %v991
    %v993 = vadd.f32 %v285, %v951
    %v994 = vxor.u32 %v993, 2147483648
    %v995 = vmul.f32 %v994, 1.442695
    %v996 = vpow.pop %v995
    %v997 = vadd.f32 %v996, 1.0
    %v998 = vrcp.pop %v997
    %v999 = vmul.f32 %v997, %v998
    %v1000 = vsub.f32 1.0, %v999
    %v1001 = vmul.f32 %v998, %v1000
    %v1002 = vadd.f32 %v998, %v1001
    %vm1003 = vweird.f32 %v997
    %vm1004 = vweird.f32 %v998
    %vm1005 = vmor %vm1003, %vm1004
    %v1006 = vsel %vm1005, %v998, %v1002
    %v1007 = vand.u32 2147483647, %v997
    %vm1008 = vcmp.eq.f32.partialorder %v1007, 8.507059e+37
    %v1009 = vand.u32 %v997, 2147483648
    %v1010 = vor.u32 1.1754944e-38, %v1009
    %v1011 = vsel %vm1008, %v1010, %v1006
    %v1012 = vmul.f32 1.0, %v1011
    %v1013 = vadd.f32 %v971, %v436
    %v1014 = vmul.f32 %v992, %v1013
    %v1015 = vadd.f32 %v326, %v1014
    %v1016 = vtanh.pop %v1015
    %v1017 = vsub.f32 1.0, %v1012
    %v1018 = vmul.f32 %v1017, %v1016
    %v1019 = vmul.f32 %v1012, %v911
    %v1020 = vadd.f32 %v1018, %v1019
    %v1021 = vsel %vm912, 1, 0
    %1022 = vset.pattern.permute.xlu0 0
    %1023 = vperm.xlu0 %1022, %v1021
    %v1024 = vpop.permute.xlu0 %1023
    %vm1025 = vcmp.eq.s32.totalorder %v1024, 1
    %v1026 = vsel %vm1025, %v1020, %v911
    %vm1027 = vcmp.gt.s32.totalorder %v63, 6
    %1028 = vmatpush.msra.mxu0 %v109
    %1029 = vmatpush.msra.mxu0 %v106
    %1030 = vmatpush.msra.mxu0 %v103
    %1031 = vmatpush.msra.mxu0 %v100
    %1032 = vmatpush.msra.mxu0 %v97
    %1033 = vmatpush.msra.mxu0 %v94
    %1034 = vmatpush.msra.mxu0 %v91
    %1035 = vmatpush.msra.mxu0 %v88
    %1036 = vmatpush.msra.mxu0 %v85
    %1037 = vmatpush.msra.mxu0 %v82
    %1038 = vmatpush.msra.mxu0 %v79
    %1039 = vmatpush.msra.mxu0 %v76
    %1040 = vmatpush.msra.mxu0 %v73
    %1041 = vmatpush.msra.mxu0 %v70
    %1042 = vmatpush.msra.mxu0 %v67
    %1043 = vmatpush.msra.mxu0 %v64
    %1044 = vmatmul.f32.gmra.mxu0 %v1026
    %v1045 = vpop.f32.mrf.mxu0
    %v1046 = vadd.f32 0.0, %v1045
    %1047 = vdwg.mxu0
    %1048 = vmatpush.msra.mxu0 %v110
    %1049 = vmatpush.msra.mxu0 %v107
    %1050 = vmatpush.msra.mxu0 %v104
    %1051 = vmatpush.msra.mxu0 %v101
    %1052 = vmatpush.msra.mxu0 %v98
    %1053 = vmatpush.msra.mxu0 %v95
    %1054 = vmatpush.msra.mxu0 %v92
    %1055 = vmatpush.msra.mxu0 %v89
    %1056 = vmatpush.msra.mxu0 %v86
    %1057 = vmatpush.msra.mxu0 %v83
    %1058 = vmatpush.msra.mxu0 %v80
    %1059 = vmatpush.msra.mxu0 %v77
    %1060 = vmatpush.msra.mxu0 %v74
    %1061 = vmatpush.msra.mxu0 %v71
    %1062 = vmatpush.msra.mxu0 %v68
    %1063 = vmatpush.msra.mxu0 %v65
    %1064 = vmatmul.f32.gmra.mxu0 %v1026
    %v1065 = vpop.f32.mrf.mxu0
    %v1066 = vadd.f32 0.0, %v1065
    %1067 = vdwg.mxu0
    %1068 = vmatpush.msra.mxu0 %v111
    %1069 = vmatpush.msra.mxu0 %v108
    %1070 = vmatpush.msra.mxu0 %v105
    %1071 = vmatpush.msra.mxu0 %v102
    %1072 = vmatpush.msra.mxu0 %v99
    %1073 = vmatpush.msra.mxu0 %v96
    %1074 = vmatpush.msra.mxu0 %v93
    %1075 = vmatpush.msra.mxu0 %v90
    %1076 = vmatpush.msra.mxu0 %v87
    %1077 = vmatpush.msra.mxu0 %v84
    %1078 = vmatpush.msra.mxu0 %v81
    %1079 = vmatpush.msra.mxu0 %v78
    %1080 = vmatpush.msra.mxu0 %v75
    %1081 = vmatpush.msra.mxu0 %v72
    %1082 = vmatpush.msra.mxu0 %v69
    %1083 = vmatpush.msra.mxu0 %v66
    %1084 = vmatmul.f32.gmra.mxu0 %v1026
    %v1085 = vpop.f32.mrf.mxu0
    %v1086 = vadd.f32 0.0, %v1085
    %1087 = vdwg.mxu0
    %v1088 = vadd.f32 %v247, %v1046
    %v1089 = vxor.u32 %v1088, 2147483648
    %v1090 = vmul.f32 %v1089, 1.442695
    %v1091 = vpow.pop %v1090
    %v1092 = vadd.f32 %v1091, 1.0
    %v1093 = vrcp.pop %v1092
    %v1094 = vmul.f32 %v1092, %v1093
    %v1095 = vsub.f32 1.0, %v1094
    %v1096 = vmul.f32 %v1093, %v1095
    %v1097 = vadd.f32 %v1093, %v1096
    %vm1098 = vweird.f32 %v1092
    %vm1099 = vweird.f32 %v1093
    %vm1100 = vmor %vm1098, %vm1099
    %v1101 = vsel %vm1100, %v1093, %v1097
    %v1102 = vand.u32 2147483647, %v1092
    %vm1103 = vcmp.eq.f32.partialorder %v1102, 8.507059e+37
    %v1104 = vand.u32 %v1092, 2147483648
    %v1105 = vor.u32 1.1754944e-38, %v1104
    %v1106 = vsel %vm1103, %v1105, %v1101
    %v1107 = vmul.f32 1.0, %v1106
    %v1108 = vadd.f32 %v288, %v1066
    %v1109 = vxor.u32 %v1108, 2147483648
    %v1110 = vmul.f32 %v1109, 1.442695
    %v1111 = vpow.pop %v1110
    %v1112 = vadd.f32 %v1111, 1.0
    %v1113 = vrcp.pop %v1112
    %v1114 = vmul.f32 %v1112, %v1113
    %v1115 = vsub.f32 1.0, %v1114
    %v1116 = vmul.f32 %v1113, %v1115
    %v1117 = vadd.f32 %v1113, %v1116
    %vm1118 = vweird.f32 %v1112
    %vm1119 = vweird.f32 %v1113
    %vm1120 = vmor %vm1118, %vm1119
    %v1121 = vsel %vm1120, %v1113, %v1117
    %v1122 = vand.u32 2147483647, %v1112
    %vm1123 = vcmp.eq.f32.partialorder %v1122, 8.507059e+37
    %v1124 = vand.u32 %v1112, 2147483648
    %v1125 = vor.u32 1.1754944e-38, %v1124
    %v1126 = vsel %vm1123, %v1125, %v1121
    %v1127 = vmul.f32 1.0, %v1126
    %v1128 = vadd.f32 %v1086, %v436
    %v1129 = vmul.f32 %v1107, %v1128
    %v1130 = vadd.f32 %v329, %v1129
    %v1131 = vtanh.pop %v1130
    %v1132 = vsub.f32 1.0, %v1127
    %v1133 = vmul.f32 %v1132, %v1131
    %v1134 = vmul.f32 %v1127, %v1026
    %v1135 = vadd.f32 %v1133, %v1134
    %v1136 = vsel %vm1027, 1, 0
    %1137 = vset.pattern.permute.xlu0 0
    %1138 = vperm.xlu0 %1137, %v1136
    %v1139 = vpop.permute.xlu0 %1138
    %vm1140 = vcmp.eq.s32.totalorder %v1139, 1
    %v1141 = vsel %vm1140, %v1135, %v1026
    %vm1142 = vcmp.gt.s32.totalorder %v63, 7
    %1143 = vmatpush.msra.mxu0 %v109
    %1144 = vmatpush.msra.mxu0 %v106
    %1145 = vmatpush.msra.mxu0 %v103
    %1146 = vmatpush.msra.mxu0 %v100
    %1147 = vmatpush.msra.mxu0 %v97
    %1148 = vmatpush.msra.mxu0 %v94
    %1149 = vmatpush.msra.mxu0 %v91
    %1150 = vmatpush.msra.mxu0 %v88
    %1151 = vmatpush.msra.mxu0 %v85
    %1152 = vmatpush.msra.mxu0 %v82
    %1153 = vmatpush.msra.mxu0 %v79
    %1154 = vmatpush.msra.mxu0 %v76
    %1155 = vmatpush.msra.mxu0 %v73
    %1156 = vmatpush.msra.mxu0 %v70
    %1157 = vmatpush.msra.mxu0 %v67
    %1158 = vmatpush.msra.mxu0 %v64
    %1159 = vmatmul.f32.gmra.mxu0 %v1141
    %v1160 = vpop.f32.mrf.mxu0
    %v1161 = vadd.f32 0.0, %v1160
    %1162 = vdwg.mxu0
    %1163 = vmatpush.msra.mxu0 %v110
    %1164 = vmatpush.msra.mxu0 %v107
    %1165 = vmatpush.msra.mxu0 %v104
    %1166 = vmatpush.msra.mxu0 %v101
    %1167 = vmatpush.msra.mxu0 %v98
    %1168 = vmatpush.msra.mxu0 %v95
    %1169 = vmatpush.msra.mxu0 %v92
    %1170 = vmatpush.msra.mxu0 %v89
    %1171 = vmatpush.msra.mxu0 %v86
    %1172 = vmatpush.msra.mxu0 %v83
    %1173 = vmatpush.msra.mxu0 %v80
    %1174 = vmatpush.msra.mxu0 %v77
    %1175 = vmatpush.msra.mxu0 %v74
    %1176 = vmatpush.msra.mxu0 %v71
    %1177 = vmatpush.msra.mxu0 %v68
    %1178 = vmatpush.msra.mxu0 %v65
    %1179 = vmatmul.f32.gmra.mxu0 %v1141
    %v1180 = vpop.f32.mrf.mxu0
    %v1181 = vadd.f32 0.0, %v1180
    %1182 = vdwg.mxu0
    %1183 = vmatpush.msra.mxu0 %v111
    %1184 = vmatpush.msra.mxu0 %v108
    %1185 = vmatpush.msra.mxu0 %v105
    %1186 = vmatpush.msra.mxu0 %v102
    %1187 = vmatpush.msra.mxu0 %v99
    %1188 = vmatpush.msra.mxu0 %v96
    %1189 = vmatpush.msra.mxu0 %v93
    %1190 = vmatpush.msra.mxu0 %v90
    %1191 = vmatpush.msra.mxu0 %v87
    %1192 = vmatpush.msra.mxu0 %v84
    %1193 = vmatpush.msra.mxu0 %v81
    %1194 = vmatpush.msra.mxu0 %v78
    %1195 = vmatpush.msra.mxu0 %v75
    %1196 = vmatpush.msra.mxu0 %v72
    %1197 = vmatpush.msra.mxu0 %v69
    %1198 = vmatpush.msra.mxu0 %v66
    %1199 = vmatmul.f32.gmra.mxu0 %v1141
    %v1200 = vpop.f32.mrf.mxu0
    %v1201 = vadd.f32 0.0, %v1200
    %1202 = vdwg.mxu0
    %v1203 = vadd.f32 %v250, %v1161
    %v1204 = vxor.u32 %v1203, 2147483648
    %v1205 = vmul.f32 %v1204, 1.442695
    %v1206 = vpow.pop %v1205
    %v1207 = vadd.f32 %v1206, 1.0
    %v1208 = vrcp.pop %v1207
    %v1209 = vmul.f32 %v1207, %v1208
    %v1210 = vsub.f32 1.0, %v1209
    %v1211 = vmul.f32 %v1208, %v1210
    %v1212 = vadd.f32 %v1208, %v1211
    %vm1213 = vweird.f32 %v1207
    %vm1214 = vweird.f32 %v1208
    %vm1215 = vmor %vm1213, %vm1214
    %v1216 = vsel %vm1215, %v1208, %v1212
    %v1217 = vand.u32 2147483647, %v1207
    %vm1218 = vcmp.eq.f32.partialorder %v1217, 8.507059e+37
    %v1219 = vand.u32 %v1207, 2147483648
    %v1220 = vor.u32 1.1754944e-38, %v1219
    %v1221 = vsel %vm1218, %v1220, %v1216
    %v1222 = vmul.f32 1.0, %v1221
    %v1223 = vadd.f32 %v291, %v1181
    %v1224 = vxor.u32 %v1223, 2147483648
    %v1225 = vmul.f32 %v1224, 1.442695
    %v1226 = vpow.pop %v1225
    %v1227 = vadd.f32 %v1226, 1.0
    %v1228 = vrcp.pop %v1227
    %v1229 = vmul.f32 %v1227, %v1228
    %v1230 = vsub.f32 1.0, %v1229
    %v1231 = vmul.f32 %v1228, %v1230
    %v1232 = vadd.f32 %v1228, %v1231
    %vm1233 = vweird.f32 %v1227
    %vm1234 = vweird.f32 %v1228
    %vm1235 = vmor %vm1233, %vm1234
    %v1236 = vsel %vm1235, %v1228, %v1232
    %v1237 = vand.u32 2147483647, %v1227
    %vm1238 = vcmp.eq.f32.partialorder %v1237, 8.507059e+37
    %v1239 = vand.u32 %v1227, 2147483648
    %v1240 = vor.u32 1.1754944e-38, %v1239
    %v1241 = vsel %vm1238, %v1240, %v1236
    %v1242 = vmul.f32 1.0, %v1241
    %v1243 = vadd.f32 %v1201, %v436
    %v1244 = vmul.f32 %v1222, %v1243
    %v1245 = vadd.f32 %v332, %v1244
    %v1246 = vtanh.pop %v1245
    %v1247 = vsub.f32 1.0, %v1242
    %v1248 = vmul.f32 %v1247, %v1246
    %v1249 = vmul.f32 %v1242, %v1141
    %v1250 = vadd.f32 %v1248, %v1249
    %v1251 = vsel %vm1142, 1, 0
    %1252 = vset.pattern.permute.xlu0 0
    %1253 = vperm.xlu0 %1252, %v1251
    %v1254 = vpop.permute.xlu0 %1253
    %vm1255 = vcmp.eq.s32.totalorder %v1254, 1
    %v1256 = vsel %vm1255, %v1250, %v1141
    %1257 = vst [vmem:[#allocation9] sm:$0xff] %v1256
    // Predicated region
    $region30: #{_doc_tower_gru.1} parent=1 // pred_check
      _
    $region31: #{_doc_tower_gru.1} parent=1 // pred_check_branch
      %1259 = sbr.rel (0) target = $region33
    $region32: #{_doc_tower_gru.1} parent=1 // pred_region
      %1261 = vsyncadd [#allocation6], 0
      %s1263 = sshll.u32 [#allocation9], 4
      %s1264 = int_to_ptr.vmem [resolvable:$true] %s1263
      %s1265 = sshll.u32 %s6, 4
      %s1266 = int_to_ptr.hbm [resolvable:$true] %s1265
      %1268 = dma.vmem_to_hbm [thread:$0]  %s1264, 128, %s1266, [#allocation6]
    $region33: #{_doc_tower_gru.1} parent=1 // pred_fallthru
      _
    // Predicated region
    $region34: #{_doc_tower_gru.1} parent=1 // pred_check
      _
    $region35: #{_doc_tower_gru.1} parent=1 // pred_check_branch
      %1270 = sbr.rel (0) target = $region37
    $region36: #{_doc_tower_gru.1} parent=1 // pred_region
      %1272 = dma.done [#allocation6], 128
    $region37: #{_doc_tower_gru.1} parent=1 // pred_fallthru
      _
    %1273 = vsyncpa [#allocation5], 1
    %1274 = vsyncpa [#allocation8], 1
    %1275 = vsyncpa [#allocation6], 1

</llo_original>
